<compile_context>
chip_gen: v7x
topology: tpu7x:2x2x1
jax: 0.10.0
libtpu: 0.0.40
codegen_flags: <defaults>
</compile_context>

<pallas_src>
import jax
import jax.numpy as jnp
from jax import lax
from jax.experimental import pallas as pl
from jax.experimental.pallas import tpu as pltpu


TILE_Q = 256   # query-pixel tile (rows of the similarity problem)
LANE = 128     # TPU lane width; channel axis is padded to a multiple of this


def _round_up(x, m):
    return ((x + m - 1) // m) * m


def _ipsr_best_match_kernel(flags_ref, bias_ref, lat_ref, ref_ref, out_ref):
    """One (batch b, query-tile q) grid step.

    flags_ref : SMEM (nq,) int32      1 -> tile contains >=1 masked query pixel
    bias_ref  : VMEM (1, HWp) f32     -1e30 on masked/padded candidate columns
    lat_ref   : VMEM (TILE_Q, Cp) bf16  L2-normalized `latter` rows (queries)
    ref_ref   : VMEM (HWp, Cp) bf16     L2-normalized `ref` rows (candidates)
    out_ref   : VMEM (TILE_Q, 1) int32  best candidate index per query row
    """
    q = pl.program_id(1)

    @pl.when(flags_ref[q] == 0)
    def _skip():
        # No masked query pixel in this tile -> indices are never consumed.
        out_ref[...] = jnp.zeros_like(out_ref)

    @pl.when(flags_ref[q] != 0)
    def _compute():
        # cosine similarity between every query pixel and every candidate (MXU, bf16)
        sim = lax.dot_general(
            lat_ref[...], ref_ref[...],
            dimension_numbers=(((1,), (1,)), ((), ())),
            preferred_element_type=jnp.float32,
        )                                   # (TILE_Q, HWp)
        sim = sim + bias_ref[...]           # suppress masked / padded candidates
        hw = sim.shape[-1]
        col = lax.broadcasted_iota(jnp.int32, (1, hw), 1)   # single row, broadcasts
        row_max = jnp.max(sim, axis=-1, keepdims=True)
        # first index attaining the max (torch argmax-first tie break)
        best = jnp.min(jnp.where(sim >= row_max, col, hw), axis=-1, keepdims=True)
        out_ref[...] = best


@jax.jit
def ipsr_forward(inp, mask, ref):
    """inp: (B, 2c, H, W) NCHW, mask: (H, W) in {0,1} (1 = masked), ref: (B, c, H, W)."""
    B, C2, H, W = inp.shape
    c = C2 // 2
    HW = H * W

    former = inp[:, :c]
    latter = inp[:, c:]

    # NHWC-flat (pixel-major, channels on lanes) views for the kernel.
    lat_flat = jnp.transpose(latter, (0, 2, 3, 1)).reshape(B, HW, c)
    ref_flat = jnp.transpose(ref, (0, 2, 3, 1)).reshape(B, HW, c)
    mask_flat = mask.reshape(HW).astype(jnp.float32)

    # L2-normalize once here (the resident ref block would otherwise be
    # re-normalized for every query tile) and feed the MXU native bf16.
    eps = jnp.float32(1e-8)
    lat_n = lat_flat * lax.rsqrt(jnp.sum(lat_flat * lat_flat, -1, keepdims=True) + eps)
    ref_n = ref_flat * lax.rsqrt(jnp.sum(ref_flat * ref_flat, -1, keepdims=True) + eps)

    # Pad channels to the 128-lane width and pixels to a multiple of TILE_Q.
    cp = _round_up(c, LANE)
    hw_pad = _round_up(HW, TILE_Q)
    nq = hw_pad // TILE_Q

    def pad_bc(x):
        return jnp.pad(x, ((0, 0), (0, hw_pad - HW), (0, cp - c)))

    lat_n = pad_bc(lat_n).astype(jnp.bfloat16)
    ref_n = pad_bc(ref_n).astype(jnp.bfloat16)

    # Padded query rows are non-masked (tiles of them are skipped); padded
    # candidate columns are masked (never selected).
    mask_row = jnp.pad(mask_flat, (0, hw_pad - HW), constant_values=0.0)
    mask_col = jnp.pad(mask_flat, (0, hw_pad - HW), constant_values=1.0)
    col_bias = (mask_col * jnp.float32(-1e30)).reshape(1, hw_pad)
    tile_flags = (jnp.max(mask_row.reshape(nq, TILE_Q), axis=1) > 0.0).astype(jnp.int32)

    best_pad = pl.pallas_call(
        _ipsr_best_match_kernel,
        out_shape=jax.ShapeDtypeStruct((B, hw_pad, 1), jnp.int32),
        grid_spec=pltpu.PrefetchScalarGridSpec(
            num_scalar_prefetch=1,
            grid=(B, nq),
            in_specs=[
                pl.BlockSpec((1, hw_pad), lambda b, q, flags: (0, 0)),            # col bias
                pl.BlockSpec((None, TILE_Q, cp), lambda b, q, flags: (b, q, 0)),  # latter tile
                pl.BlockSpec((None, hw_pad, cp), lambda b, q, flags: (b, 0, 0)),  # resident ref
            ],
            out_specs=pl.BlockSpec((None, TILE_Q, 1), lambda b, q, flags: (b, q, 0)),
        ),
        compiler_params=pltpu.CompilerParams(
            dimension_semantics=("parallel", "parallel"),
            vmem_limit_bytes=48 * 1024 * 1024,
        ),
    )(tile_flags, col_bias, lat_n, ref_n)

    # Exact feature paste: gather the winning (unquantized, f32) ref rows and
    # keep them only at masked pixels.
    best = best_pad[:, :HW, 0]                                  # (B, HW) int32
    gathered = jax.vmap(lambda r, i: r[i])(ref_flat, best)      # (B, HW, c)
    shift_flat = jnp.where(mask_flat.reshape(1, HW, 1) >= 1.0, gathered, 0.0)
    shift = jnp.transpose(shift_flat.reshape(B, H, W, c), (0, 3, 1, 2)).astype(inp.dtype)

    # IPSRFunction forward output: cat(former, latter, shift) along channels.
    return jnp.concatenate([former, latter, shift], axis=1)     # (B, 3c, H, W)


if __name__ == "__main__":
    key = jax.random.PRNGKey(0)
    k1, k2 = jax.random.split(key)

    B, c, H, W = 2, 4, 16, 16
    x = jax.random.normal(k1, (B, 2 * c, H, W), dtype=jnp.float32)
    latent_ref = jax.random.normal(k2, (B, c, H, W), dtype=jnp.float32)

    # feature-level mask: a square hole in the middle (1 = masked)
    mask = jnp.zeros((H, W), dtype=jnp.float32).at[4:12, 4:12].set(1.0)

    out = jax.block_until_ready(ipsr_forward(x, mask, latent_ref))

    assert out.shape == (B, 3 * c, H, W), out.shape
    assert bool(jnp.all(jnp.isfinite(out)))
    # former / latter pass through untouched
    assert bool(jnp.all(out[:, : 2 * c] == x))
    # shift slab is zero outside the mask
    shift_out = out[:, 2 * c:]
    assert bool(jnp.all(jnp.where(mask[None, None] == 0.0, shift_out, 0.0) == 0.0))
    print("KERNEL_OK")
</pallas_src>

<mosaic_0001>
module attributes {stable_mosaic.version = 11 : i64} {
  func.func @_ipsr_best_match_kernel(%arg0: i32, %arg1: i32, %arg2: memref<1xi32, #tpu.memory_space<smem>>, %arg3: memref<1x256xf32, #tpu.memory_space<vmem>>, %arg4: memref<1x256x128xbf16, #tpu.memory_space<vmem>>, %arg5: memref<1x256x128xbf16, #tpu.memory_space<vmem>>, %arg6: memref<1x256x1xi32, #tpu.memory_space<vmem>>) attributes {dimension_semantics = [#tpu.dimension_semantics<parallel>, #tpu.dimension_semantics<parallel>], iteration_bounds = array<i64: 2, 1>, scalar_prefetch = 1 : i64, scratch_operands = 0 : i64, tpu.core_type = #tpu.core_type<tc>, window_params = [{pipeline_mode = #tpu.pipeline_mode<synchronous>, transform_indices = @transform_0, window_bounds = array<i64: 1, 256>}, {transform_indices = @transform_1, window_bounds = array<i64: 1, 256, 128>}, {transform_indices = @transform_2, window_bounds = array<i64: 1, 256, 128>}, {transform_indices = @transform_3, window_bounds = array<i64: 1, 256, 1>}]} {
    %0 = arith.index_cast %arg1 : i32 to index
    %1 = memref.load %arg2[%0] : memref<1xi32, #tpu.memory_space<smem>>
    %c0_i32 = arith.constant 0 : i32
    %2 = arith.cmpi eq, %1, %c0_i32 : i32
    %3 = arith.extui %2 : i1 to i32
    %c0_i32_0 = arith.constant 0 : i32
    %4 = arith.cmpi ne, %3, %c0_i32_0 : i32
    scf.if %4 {
      %c0_i32_3 = arith.constant 0 : i32
      %10 = vector.broadcast %c0_i32_3 : i32 to vector<256x1xi32>
      %c0 = arith.constant 0 : index
      %c0_4 = arith.constant 0 : index
      %c0_5 = arith.constant 0 : index
      %11 = vector.load %arg6[%c0, %c0_4, %c0_5] : memref<1x256x1xi32, #tpu.memory_space<vmem>>, vector<1x256x1xi32>
      %12 = vector.shape_cast %11 : vector<1x256x1xi32> to vector<256x1xi32>
      %13 = vector.shape_cast %10 : vector<256x1xi32> to vector<1x256x1xi32>
      tpu.vector_store %arg6[%c0, %c0_4, %c0_5], %13 {strides = array<i32>} : memref<1x256x1xi32, #tpu.memory_space<vmem>>, vector<1x256x1xi32>,
    } else {
    }
    %5 = arith.index_cast %arg1 : i32 to index
    %6 = memref.load %arg2[%5] : memref<1xi32, #tpu.memory_space<smem>>
    %c0_i32_1 = arith.constant 0 : i32
    %7 = arith.cmpi ne, %6, %c0_i32_1 : i32
    %8 = arith.extui %7 : i1 to i32
    %c0_i32_2 = arith.constant 0 : i32
    %9 = arith.cmpi ne, %8, %c0_i32_2 : i32
    scf.if %9 {
      %c0 = arith.constant 0 : index
      %c0_3 = arith.constant 0 : index
      %c0_4 = arith.constant 0 : index
      %10 = vector.load %arg4[%c0, %c0_3, %c0_4] : memref<1x256x128xbf16, #tpu.memory_space<vmem>>, vector<1x256x128xbf16>
      %11 = vector.shape_cast %10 : vector<1x256x128xbf16> to vector<256x128xbf16>
      %c0_5 = arith.constant 0 : index
      %c0_6 = arith.constant 0 : index
      %c0_7 = arith.constant 0 : index
      %12 = vector.load %arg5[%c0_5, %c0_6, %c0_7] : memref<1x256x128xbf16, #tpu.memory_space<vmem>>, vector<1x256x128xbf16>
      %13 = vector.shape_cast %12 : vector<1x256x128xbf16> to vector<256x128xbf16>
      %cst = arith.constant dense<0.000000e+00> : vector<256x256xf32>
      %14 = tpu.matmul %11, %13, %cst {dimension_numbers = #tpu.dot_dimension_numbers<[1], [1], [0], [0], [0, 0, 1, 0], [], []>} : vector<256x128xbf16>, vector<256x128xbf16>, vector<256x256xf32> -> vector<256x256xf32>
      %c0_8 = arith.constant 0 : index
      %c0_9 = arith.constant 0 : index
      %15 = vector.load %arg3[%c0_8, %c0_9] : memref<1x256xf32, #tpu.memory_space<vmem>>, vector<1x256xf32>
      %16 = vector.broadcast %15 : vector<1x256xf32> to vector<256x256xf32>
      %17 = arith.addf %14, %16 : vector<256x256xf32>
      %18 = tpu.iota {dimensions = array<i32: 1>} : vector<1x256xi32>
      %cst_10 = arith.constant dense<0xFF800000> : vector<256xf32>
      %19 = vector.multi_reduction <maximumf>, %17, %cst_10 [1] : vector<256x256xf32> to vector<256xf32>
      %20 = vector.shape_cast %19 : vector<256xf32> to vector<256x1xf32>
      %21 = vector.broadcast %20 : vector<256x1xf32> to vector<256x256xf32>
      %22 = arith.cmpf oge, %17, %21 : vector<256x256xf32>
      %c256_i32 = arith.constant 256 : i32
      %23 = vector.shape_cast %18 : vector<1x256xi32> to vector<1x256xi32>
      %24 = vector.broadcast %23 : vector<1x256xi32> to vector<256x256xi32>
      %25 = vector.broadcast %c256_i32 : i32 to vector<256x256xi32>
      %26 = arith.select %22, %24, %25 : vector<256x256xi1>, vector<256x256xi32>
      %cst_11 = arith.constant dense<2147483647> : vector<256xi32>
      %27 = vector.multi_reduction <minsi>, %26, %cst_11 [1] : vector<256x256xi32> to vector<256xi32>
      %28 = vector.shape_cast %27 : vector<256xi32> to vector<256x1xi32>
      %c0_12 = arith.constant 0 : index
      %c0_13 = arith.constant 0 : index
      %c0_14 = arith.constant 0 : index
      %29 = vector.load %arg6[%c0_12, %c0_13, %c0_14] : memref<1x256x1xi32, #tpu.memory_space<vmem>>, vector<1x256x1xi32>
      %30 = vector.shape_cast %29 : vector<1x256x1xi32> to vector<256x1xi32>
      %31 = vector.shape_cast %28 : vector<256x1xi32> to vector<1x256x1xi32>
      tpu.vector_store %arg6[%c0_12, %c0_13, %c0_14], %31 {strides = array<i32>} : memref<1x256x1xi32, #tpu.memory_space<vmem>>, vector<1x256x1xi32>,
    } else {
    }
    return
  }
  func.func @transform_0(%arg0: i32, %arg1: i32, %arg2: memref<1xi32, #tpu.memory_space<smem>>) -> (i32, i32) {
    %c0_i32 = arith.constant 0 : i32
    %c0_i32_0 = arith.constant 0 : i32
    %c0_i32_1 = arith.constant 0 : i32
    return %c0_i32, %c0_i32_0 : i32, i32
  }
  func.func @transform_1(%arg0: i32, %arg1: i32, %arg2: memref<1xi32, #tpu.memory_space<smem>>) -> (i32, i32, i32) {
    %c0_i32 = arith.constant 0 : i32
    %c0_i32_0 = arith.constant 0 : i32
    return %arg0, %arg1, %c0_i32 : i32, i32, i32
  }
  func.func @transform_2(%arg0: i32, %arg1: i32, %arg2: memref<1xi32, #tpu.memory_space<smem>>) -> (i32, i32, i32) {
    %c0_i32 = arith.constant 0 : i32
    %c0_i32_0 = arith.constant 0 : i32
    %c0_i32_1 = arith.constant 0 : i32
    return %arg0, %c0_i32, %c0_i32_0 : i32, i32, i32
  }
  func.func @transform_3(%arg0: i32, %arg1: i32, %arg2: memref<1xi32, #tpu.memory_space<smem>>) -> (i32, i32, i32) {
    %c0_i32 = arith.constant 0 : i32
    %c0_i32_0 = arith.constant 0 : i32
    return %arg0, %arg1, %c0_i32 : i32, i32, i32
  }
}

</mosaic_0001>

<llo_original>
// kernel: ipsr_forward.1
$region0: #{ipsr_forward.1}
  #allocation0 [shape = 'u32[]', space=smem, size = 0x4, offset = 0x4, fixed_abs, tag = 'smem constant byte address 0x4 - core index']
  #allocation1 [shape = 'u32[144,128]{1,0:T(1,128)}', space=vmem, size = 0x12000, scoped, tag = 'internal scratch']
  #allocation2 [shape = 's32[1]{0}', space=sflag, size = 0x4, scoped, tag = 'scoped memory for ipsr_forward.1']
  #allocation3 [shape = 's32[1]{0:T(128)S(6)}', space=smem, size = 0x200, scoped, tag = 'prefetched SMEM operand 0']
  %s0 = inlined_call_operand.<no memory space> [shape: s32[1], index: 0, kind: input, shape index: {}]
  %s1 = inlined_call_operand.vmem [shape: f32[1,256], index: 1, kind: input, shape index: {}]
  %s2 = inlined_call_operand.vmem [shape: bf16[2,256,128], index: 2, kind: input, shape index: {}]
  %s3 = inlined_call_operand.vmem [shape: bf16[2,256,128], index: 3, kind: input, shape index: {}]
  %s4 = inlined_call_operand.vmem [shape: s32[2,256,1], index: 4, kind: output, shape index: {}]
  %s5 = sld [smem:[#allocation0]]
  $region53: #{ipsr_forward.1} parent=0
    _
  %s7 = ssub.s32 1, %s5
  %s8 = scalar_select 0, %s7, %s5
  %9 = sst [smem:[#allocation3]] %s0
  loop: start=0, step=1, limit=4
  $region2: #{ipsr_forward.1} parent=0 // loop_pre_header
    _
  $region3: #{ipsr_forward.1} parent=0 // loop_header
    %s11 = sphi 0, %s15
    %p12 = scmp.ge.s32.totalorder %s11, 4
    %s18 = sphi 0, %s30
    %s19 = sphi 0, %s26
    %s20 = sphi 0, %s18
    %s21 = sphi 0, %s19
    %s22 = sphi 0, %s20
    %s23 = sphi 0, %s21
    %s31 = sphi 0, %s31
    %s33 = sphi 0, %s31
    %s34 = sphi 0, %s33
    %s48 = sphi 0, %s34
    %s56 = sphi 0, %s58
    %s59 = sphi 0, %s56
    %s60 = sphi 0, %s59
    %s76 = sphi 0, %s60
    %s82 = sphi 0, %s84
    %s85 = sphi 0, %s82
    %s86 = sphi 0, %s85
    %s102 = sphi 0, %s86
    %s110 = sphi 0, %s112
    %s113 = sphi 0, %s110
    %s114 = sphi 0, %s113
    %s130 = sphi 0, %s114
  $region4: #{ipsr_forward.1} parent=0 // loop_header_branch
    %14 = sbr.rel (%p12) target = $region8
  $region5: #{ipsr_forward.1} parent=0 // loop_body
    %s16 = ssub.s32 %s11, 1
    %s17 = ssub.s32 %s11, 2
    %s24 = sadd.s32 1, %s19
    %p25 = scmp.ge.s32.totalorder %s24, 1
    %s26 = scalar_select %p25, 0, %s24
    %s27 = sadd.s32 1, %s18
    %s28 = scalar_select %p25, %s27, %s18
    %p29 = scmp.ge.s32.totalorder %s28, 2
    %s30 = scalar_select %p29, 0, %s28
    %s32 = sadd.s32 %s31, 1
    %p35 = scmp.eq.s32.totalorder %s11, 1
    %p36 = scmp.ne.s32.totalorder %s31, %s33
    %p37 = scmp.eq.s32.totalorder %s11, 0
    %p38 = por %p36, %p37
    %p39 = scmp.ne.s32.totalorder %s31, %s33
    %p40 = scmp.eq.s32.totalorder %s16, 1
    %p41 = por %p39, %p40
    %p42 = scmp.ne.s32.totalorder %s33, %s34
    %p43 = scmp.eq.s32.totalorder %s16, 0
    %p44 = por %p42, %p43
    %p45 = scmp.ne.s32.totalorder %s33, %s34
    %p46 = scmp.eq.s32.totalorder %s17, 1
    %p47 = por %p45, %p46
    %p49 = scmp.ne.s32.totalorder %s34, %s48
    %p50 = scmp.eq.s32.totalorder %s17, 0
    %p51 = por %p49, %p50
    %s52 = ssub.s32 %s18, %s30
    %s53 = ssub.s32 %s19, %s26
    %s54 = sor.u32 %s52, %s53
    %p55 = scmp.eq.s32.totalorder %s54, 0
    %s57 = sadd.s32 %s56, 1
    %s58 = scalar_select %p55, %s56, %s57
    %p61 = pneg %p55
    %p62 = scmp.eq.s32.totalorder %s11, 1
    %p63 = por %p61, %p62
    %p64 = scmp.ne.s32.totalorder %s56, %s59
    %p65 = scmp.eq.s32.totalorder %s11, 0
    %p66 = por %p64, %p65
    %p67 = scmp.ne.s32.totalorder %s56, %s59
    %p68 = scmp.eq.s32.totalorder %s16, 1
    %p69 = por %p67, %p68
    %p70 = scmp.ne.s32.totalorder %s59, %s60
    %p71 = scmp.eq.s32.totalorder %s16, 0
    %p72 = por %p70, %p71
    %p73 = scmp.ne.s32.totalorder %s59, %s60
    %p74 = scmp.eq.s32.totalorder %s17, 1
    %p75 = por %p73, %p74
    %p77 = scmp.ne.s32.totalorder %s60, %s76
    %p78 = scmp.eq.s32.totalorder %s17, 0
    %p79 = por %p77, %p78
    %s80 = ssub.s32 %s18, %s30
    %p81 = scmp.eq.s32.totalorder %s80, 0
    %s83 = sadd.s32 %s82, 1
    %s84 = scalar_select %p81, %s82, %s83
    %p87 = pneg %p81
    %p88 = scmp.eq.s32.totalorder %s11, 1
    %p89 = por %p87, %p88
    %p90 = scmp.ne.s32.totalorder %s82, %s85
    %p91 = scmp.eq.s32.totalorder %s11, 0
    %p92 = por %p90, %p91
    %p93 = scmp.ne.s32.totalorder %s82, %s85
    %p94 = scmp.eq.s32.totalorder %s16, 1
    %p95 = por %p93, %p94
    %p96 = scmp.ne.s32.totalorder %s85, %s86
    %p97 = scmp.eq.s32.totalorder %s16, 0
    %p98 = por %p96, %p97
    %p99 = scmp.ne.s32.totalorder %s85, %s86
    %p100 = scmp.eq.s32.totalorder %s17, 1
    %p101 = por %p99, %p100
    %p103 = scmp.ne.s32.totalorder %s86, %s102
    %p104 = scmp.eq.s32.totalorder %s17, 0
    %p105 = por %p103, %p104
    %s106 = ssub.s32 %s18, %s30
    %s107 = ssub.s32 %s19, %s26
    %s108 = sor.u32 %s106, %s107
    %p109 = scmp.eq.s32.totalorder %s108, 0
    %s111 = sadd.s32 %s110, 1
    %s112 = scalar_select %p109, %s110, %s111
    %p115 = pneg %p109
    %p116 = scmp.eq.s32.totalorder %s11, 1
    %p117 = por %p115, %p116
    %p118 = scmp.ne.s32.totalorder %s110, %s113
    %p119 = scmp.eq.s32.totalorder %s11, 0
    %p120 = por %p118, %p119
    %p121 = scmp.ne.s32.totalorder %s110, %s113
    %p122 = scmp.eq.s32.totalorder %s16, 1
    %p123 = por %p121, %p122
    %p124 = scmp.ne.s32.totalorder %s113, %s114
    %p125 = scmp.eq.s32.totalorder %s16, 0
    %p126 = por %p124, %p125
    %p127 = scmp.ne.s32.totalorder %s113, %s114
    %p128 = scmp.eq.s32.totalorder %s17, 1
    %p129 = por %p127, %p128
    %p131 = scmp.ne.s32.totalorder %s114, %s130
    %p132 = scmp.eq.s32.totalorder %s17, 0
    %p133 = por %p131, %p132
    %p134 = scmp.le.s32.totalorder 1, %s11
    %p135 = scmp.lt.s32.totalorder %s11, 3
    %p136 = pnand %p134, %p135
    %p137 = pneg %p136
    // Predicated region
    $region9: #{ipsr_forward.1} parent=5 // pred_check
      _
    $region10: #{ipsr_forward.1} parent=5 // pred_check_branch
      %139 = sbr.rel (%p136) target = $region12
    $region11: #{ipsr_forward.1} parent=5 // pred_region
      %s140 = ssub.s32 %s11, 1
      // Predicated region
      $region13: #{ipsr_forward.1} parent=11 // pred_check
        %p141 = pneg %p44
      $region14: #{ipsr_forward.1} parent=11 // pred_check_branch
        %143 = sbr.rel (%p141) target = $region16
      $region15: #{ipsr_forward.1} parent=11 // pred_region
        _
      $region16: #{ipsr_forward.1} parent=11 // pred_fallthru
        _
    $region12: #{ipsr_forward.1} parent=5 // pred_fallthru
      _
    %p144 = scmp.lt.s32.totalorder %s11, 2
    // Predicated region
    $region17: #{ipsr_forward.1} parent=5 // pred_check
      %p145 = pneg %p144
    $region18: #{ipsr_forward.1} parent=5 // pred_check_branch
      %147 = sbr.rel (%p145) target = $region20
    $region19: #{ipsr_forward.1} parent=5 // pred_region
      // Predicated region
      $region21: #{ipsr_forward.1} parent=19 // pred_check
        %p148 = pneg %p66
      $region22: #{ipsr_forward.1} parent=19 // pred_check_branch
        %150 = sbr.rel (%p148) target = $region24
      $region23: #{ipsr_forward.1} parent=19 // pred_region
        %s151 = smul.u32 32, %s19
        %p152 = scmp.lt.s32.totalorder %s18, 1
        %s153 = scalar_select %p152, %s18, 1
        %p154 = scmp.lt.s32.totalorder %s151, 31
        %s155 = scalar_select %p154, %s151, 31
        %s156 = smul.addr %s153, 32
        %s157 = sadd.s32 %s155, %s156
        %s158 = smul.addr %s157, 4
        %s159 = scalar_lea.vmem %s2, %s158
        %s160 = smul.u32 32, %s19
      $region24: #{ipsr_forward.1} parent=19 // pred_fallthru
        _
      // Predicated region
      $region25: #{ipsr_forward.1} parent=19 // pred_check
        %p161 = pneg %p92
      $region26: #{ipsr_forward.1} parent=19 // pred_check_branch
        %163 = sbr.rel (%p161) target = $region28
      $region27: #{ipsr_forward.1} parent=19 // pred_region
        %p164 = scmp.lt.s32.totalorder %s18, 1
        %s165 = scalar_select %p164, %s18, 1
        %s166 = smul.addr %s165, 32
        %s167 = smul.addr %s166, 4
        %s168 = scalar_lea.vmem %s3, %s167
      $region28: #{ipsr_forward.1} parent=19 // pred_fallthru
        _
    $region20: #{ipsr_forward.1} parent=5 // pred_fallthru
      _
    %p169 = scmp.le.s32.totalorder 1, %s11
    %p170 = scmp.lt.s32.totalorder %s11, 3
    %p171 = pnand %p169, %p170
    %p172 = pneg %p171
    // Predicated region
    $region29: #{ipsr_forward.1} parent=5 // pred_check
      _
    $region30: #{ipsr_forward.1} parent=5 // pred_check_branch
      %174 = sbr.rel (%p171) target = $region32
    $region31: #{ipsr_forward.1} parent=5 // pred_region
      %s175 = ssub.s32 %s11, 1
      %p176 = pneg %p44
      %p177 = pneg %p41
      %s178 = smul.u32 32, %s21
      %p179 = scmp.lt.s32.totalorder %s20, 1
      %s180 = scalar_select %p179, %s20, 1
      %p181 = scmp.lt.s32.totalorder %s178, 31
      %s182 = scalar_select %p181, %s178, 31
      %s183 = smul.addr %s180, 32
      %s184 = sadd.s32 %s182, %s183
      %s185 = smul.addr %s184, 4
      %s186 = scalar_lea.vmem %s2, %s185
      %p187 = pneg %p72
      %p188 = pneg %p69
      %p189 = scmp.lt.s32.totalorder %s20, 1
      %s190 = scalar_select %p189, %s20, 1
      %s191 = smul.addr %s190, 32
      %s192 = smul.addr %s191, 4
      %s193 = scalar_lea.vmem %s3, %s192
      %p194 = pneg %p98
      %p195 = pneg %p95
      %p196 = pneg %p126
      %p197 = pneg %p123
      %s198 = smul.u32 32, %s21
      %p199 = scmp.lt.s32.totalorder %s20, 1
      %s200 = scalar_select %p199, %s20, 1
      %p201 = scmp.lt.s32.totalorder %s198, 31
      %s202 = scalar_select %p201, %s198, 31
      %s203 = smul.addr %s200, 32
      %s204 = sadd.s32 %s202, %s203
      %s205 = smul.addr %s204, 8
      %s206 = scalar_lea.vmem %s4, %s205
      %s207 = smul.u32 32, %s21
      %p208 = scmp.lt.s32.totalorder %s20, 1
      %s209 = scalar_select %p208, %s20, 1
      %p210 = scmp.lt.s32.totalorder %s207, 31
      %s211 = scalar_select %p210, %s207, 31
      %s212 = smul.addr %s209, 32
      %s213 = sadd.s32 %s211, %s212
      %s214 = smul.addr %s213, 4
      %s215 = scalar_lea.vmem %s2, %s214
      %s216 = smul.u32 32, %s21
      %p217 = scmp.lt.s32.totalorder %s20, 1
      %s218 = scalar_select %p217, %s20, 1
      %s219 = smul.addr %s218, 32
      %s220 = smul.addr %s219, 4
      %s221 = scalar_lea.vmem %s3, %s220
      %s222 = smul.u32 32, %s21
      %p223 = scmp.lt.s32.totalorder %s20, 1
      %s224 = scalar_select %p223, %s20, 1
      %p225 = scmp.lt.s32.totalorder %s222, 31
      %s226 = scalar_select %p225, %s222, 31
      %s227 = smul.addr %s224, 32
      %s228 = sadd.s32 %s226, %s227
      %s229 = smul.addr %s228, 8
      %s230 = scalar_lea.vmem %s4, %s229
      %s231 = smul.u32 32, %s21
      %s233 = sld [smem:[#allocation3 + %s21]]
      %p234 = scmp.eq.s32.totalorder %s233, 0
      // Predicated region
      $region33: #{ipsr_forward.1} parent=31 // pred_check
        %p235 = pneg %p234
      $region34: #{ipsr_forward.1} parent=31 // pred_check_branch
        %237 = sbr.rel (%p235) target = $region36
      $region35: #{ipsr_forward.1} parent=31 // pred_region
        %vm238 = vcmask 7168
        %239 = vst.msk [vmem:[%s230] sm:$0xff] %vm238, 0
        %240 = vst.msk [vmem:[%s230 + $0x8] sm:$0xff] %vm238, 0
        %241 = vst.msk [vmem:[%s230 + $0x10] sm:$0xff] %vm238, 0
        %242 = vst.msk [vmem:[%s230 + $0x18] sm:$0xff] %vm238, 0
        %243 = vst.msk [vmem:[%s230 + $0x20] sm:$0xff] %vm238, 0
        %244 = vst.msk [vmem:[%s230 + $0x28] sm:$0xff] %vm238, 0
        %245 = vst.msk [vmem:[%s230 + $0x30] sm:$0xff] %vm238, 0
        %246 = vst.msk [vmem:[%s230 + $0x38] sm:$0xff] %vm238, 0
        %247 = vst.msk [vmem:[%s230 + $0x40] sm:$0xff] %vm238, 0
        %248 = vst.msk [vmem:[%s230 + $0x48] sm:$0xff] %vm238, 0
        %249 = vst.msk [vmem:[%s230 + $0x50] sm:$0xff] %vm238, 0
        %250 = vst.msk [vmem:[%s230 + $0x58] sm:$0xff] %vm238, 0
        %251 = vst.msk [vmem:[%s230 + $0x60] sm:$0xff] %vm238, 0
        %252 = vst.msk [vmem:[%s230 + $0x68] sm:$0xff] %vm238, 0
        %253 = vst.msk [vmem:[%s230 + $0x70] sm:$0xff] %vm238, 0
        %254 = vst.msk [vmem:[%s230 + $0x78] sm:$0xff] %vm238, 0
        %255 = vst.msk [vmem:[%s230 + $0x80] sm:$0xff] %vm238, 0
        %256 = vst.msk [vmem:[%s230 + $0x88] sm:$0xff] %vm238, 0
        %257 = vst.msk [vmem:[%s230 + $0x90] sm:$0xff] %vm238, 0
        %258 = vst.msk [vmem:[%s230 + $0x98] sm:$0xff] %vm238, 0
        %259 = vst.msk [vmem:[%s230 + $0xa0] sm:$0xff] %vm238, 0
        %260 = vst.msk [vmem:[%s230 + $0xa8] sm:$0xff] %vm238, 0
        %261 = vst.msk [vmem:[%s230 + $0xb0] sm:$0xff] %vm238, 0
        %262 = vst.msk [vmem:[%s230 + $0xb8] sm:$0xff] %vm238, 0
        %263 = vst.msk [vmem:[%s230 + $0xc0] sm:$0xff] %vm238, 0
        %264 = vst.msk [vmem:[%s230 + $0xc8] sm:$0xff] %vm238, 0
        %265 = vst.msk [vmem:[%s230 + $0xd0] sm:$0xff] %vm238, 0
        %266 = vst.msk [vmem:[%s230 + $0xd8] sm:$0xff] %vm238, 0
        %267 = vst.msk [vmem:[%s230 + $0xe0] sm:$0xff] %vm238, 0
        %268 = vst.msk [vmem:[%s230 + $0xe8] sm:$0xff] %vm238, 0
        %269 = vst.msk [vmem:[%s230 + $0xf0] sm:$0xff] %vm238, 0
        %270 = vst.msk [vmem:[%s230 + $0xf8] sm:$0xff] %vm238, 0
      $region36: #{ipsr_forward.1} parent=31 // pred_fallthru
        _
      %s271 = sld [smem:[#allocation3 + %s21]]
      %p272 = scmp.ne.s32.totalorder %s271, 0
      // Predicated region
      $region37: #{ipsr_forward.1} parent=31 // pred_check
        %p273 = pneg %p272
      $region38: #{ipsr_forward.1} parent=31 // pred_check_branch
        %275 = sbr.rel (%p273) target = $region40
      $region39: #{ipsr_forward.1} parent=31 // pred_region
        %v276 = vld [vmem:[%s215] sm:$0xf]
        %v277 = vld [vmem:[%s215 + $0x4] sm:$0xf]
        %v278 = vld [vmem:[%s215 + $0x8] sm:$0xf]
        %v279 = vld [vmem:[%s215 + $0xc] sm:$0xf]
        %v280 = vld [vmem:[%s215 + $0x10] sm:$0xf]
        %v281 = vld [vmem:[%s215 + $0x14] sm:$0xf]
        %v282 = vld [vmem:[%s215 + $0x18] sm:$0xf]
        %v283 = vld [vmem:[%s215 + $0x1c] sm:$0xf]
        %v284 = vld [vmem:[%s215 + $0x20] sm:$0xf]
        %v285 = vld [vmem:[%s215 + $0x24] sm:$0xf]
        %v286 = vld [vmem:[%s215 + $0x28] sm:$0xf]
        %v287 = vld [vmem:[%s215 + $0x2c] sm:$0xf]
        %v288 = vld [vmem:[%s215 + $0x30] sm:$0xf]
        %v289 = vld [vmem:[%s215 + $0x34] sm:$0xf]
        %v290 = vld [vmem:[%s215 + $0x38] sm:$0xf]
        %v291 = vld [vmem:[%s215 + $0x3c] sm:$0xf]
        %v292 = vld [vmem:[%s215 + $0x40] sm:$0xf]
        %v293 = vld [vmem:[%s215 + $0x44] sm:$0xf]
        %v294 = vld [vmem:[%s215 + $0x48] sm:$0xf]
        %v295 = vld [vmem:[%s215 + $0x4c] sm:$0xf]
        %v296 = vld [vmem:[%s215 + $0x50] sm:$0xf]
        %v297 = vld [vmem:[%s215 + $0x54] sm:$0xf]
        %v298 = vld [vmem:[%s215 + $0x58] sm:$0xf]
        %v299 = vld [vmem:[%s215 + $0x5c] sm:$0xf]
        %v300 = vld [vmem:[%s215 + $0x60] sm:$0xf]
        %v301 = vld [vmem:[%s215 + $0x64] sm:$0xf]
        %v302 = vld [vmem:[%s215 + $0x68] sm:$0xf]
        %v303 = vld [vmem:[%s215 + $0x6c] sm:$0xf]
        %v304 = vld [vmem:[%s215 + $0x70] sm:$0xf]
        %v305 = vld [vmem:[%s215 + $0x74] sm:$0xf]
        %v306 = vld [vmem:[%s215 + $0x78] sm:$0xf]
        %v307 = vld [vmem:[%s215 + $0x7c] sm:$0xf]
        %v308 = vld [vmem:[%s221] sm:$0xf]
        %v309 = vld [vmem:[%s221 + $0x4] sm:$0xf]
        %v310 = vld [vmem:[%s221 + $0x8] sm:$0xf]
        %v311 = vld [vmem:[%s221 + $0xc] sm:$0xf]
        %v312 = vld [vmem:[%s221 + $0x10] sm:$0xf]
        %v313 = vld [vmem:[%s221 + $0x14] sm:$0xf]
        %v314 = vld [vmem:[%s221 + $0x18] sm:$0xf]
        %v315 = vld [vmem:[%s221 + $0x1c] sm:$0xf]
        %v316 = vld [vmem:[%s221 + $0x20] sm:$0xf]
        %v317 = vld [vmem:[%s221 + $0x24] sm:$0xf]
        %v318 = vld [vmem:[%s221 + $0x28] sm:$0xf]
        %v319 = vld [vmem:[%s221 + $0x2c] sm:$0xf]
        %v320 = vld [vmem:[%s221 + $0x30] sm:$0xf]
        %v321 = vld [vmem:[%s221 + $0x34] sm:$0xf]
        %v322 = vld [vmem:[%s221 + $0x38] sm:$0xf]
        %v323 = vld [vmem:[%s221 + $0x3c] sm:$0xf]
        %v324 = vld [vmem:[%s221 + $0x40] sm:$0xf]
        %v325 = vld [vmem:[%s221 + $0x44] sm:$0xf]
        %v326 = vld [vmem:[%s221 + $0x48] sm:$0xf]
        %v327 = vld [vmem:[%s221 + $0x4c] sm:$0xf]
        %v328 = vld [vmem:[%s221 + $0x50] sm:$0xf]
        %v329 = vld [vmem:[%s221 + $0x54] sm:$0xf]
        %v330 = vld [vmem:[%s221 + $0x58] sm:$0xf]
        %v331 = vld [vmem:[%s221 + $0x5c] sm:$0xf]
        %v332 = vld [vmem:[%s221 + $0x60] sm:$0xf]
        %v333 = vld [vmem:[%s221 + $0x64] sm:$0xf]
        %v334 = vld [vmem:[%s221 + $0x68] sm:$0xf]
        %v335 = vld [vmem:[%s221 + $0x6c] sm:$0xf]
        %v336 = vld [vmem:[%s221 + $0x70] sm:$0xf]
        %v337 = vld [vmem:[%s221 + $0x74] sm:$0xf]
        %v338 = vld [vmem:[%s221 + $0x78] sm:$0xf]
        %v339 = vld [vmem:[%s221 + $0x7c] sm:$0xf]
        %v340 = vld [vmem:[%s1] sm:$0x3]
        %v342 = vlaneseq
        %v343 = vshrl.u32 %v342, 7
        %v344 = vsub.s32 0, %v343
        %v345 = vrot.slane %v340, %v344
        %v346 = vlaneseq
        %v347 = vshrl.u32 %v346, 7
        %v348 = vsub.s32 1, %v347
        %v349 = vrot.slane %v340, %v348
        %v384 = vunpack.c.l.b16 %v276
        %v385 = vunpack.c.l.b16 %v277
        %v386 = vunpack.c.l.b16 %v278
        %v387 = vunpack.c.l.b16 %v279
        %v388 = vunpack.c.l.b16 %v280
        %v389 = vunpack.c.l.b16 %v281
        %v390 = vunpack.c.l.b16 %v282
        %v391 = vunpack.c.l.b16 %v283
        %v392 = vunpack.c.l.b16 %v284
        %v393 = vunpack.c.l.b16 %v285
        %v394 = vunpack.c.l.b16 %v286
        %v395 = vunpack.c.l.b16 %v287
        %v396 = vunpack.c.l.b16 %v288
        %v397 = vunpack.c.l.b16 %v289
        %v398 = vunpack.c.l.b16 %v290
        %v399 = vunpack.c.l.b16 %v291
        %v400 = vunpack.c.l.b16 %v292
        %v401 = vunpack.c.l.b16 %v293
        %v402 = vunpack.c.l.b16 %v294
        %v403 = vunpack.c.l.b16 %v295
        %v404 = vunpack.c.l.b16 %v296
        %v405 = vunpack.c.l.b16 %v297
        %v406 = vunpack.c.l.b16 %v298
        %v407 = vunpack.c.l.b16 %v299
        %v408 = vunpack.c.l.b16 %v300
        %v409 = vunpack.c.l.b16 %v301
        %v410 = vunpack.c.l.b16 %v302
        %v411 = vunpack.c.l.b16 %v303
        %v412 = vunpack.c.l.b16 %v304
        %v413 = vunpack.c.l.b16 %v305
        %v414 = vunpack.c.l.b16 %v306
        %v415 = vunpack.c.l.b16 %v307
        %v416 = vpack.c.b16 %v385, %v384
        %v417 = vpack.c.b16 %v387, %v386
        %v418 = vpack.c.b16 %v389, %v388
        %v419 = vpack.c.b16 %v391, %v390
        %v420 = vpack.c.b16 %v393, %v392
        %v421 = vpack.c.b16 %v395, %v394
        %v422 = vpack.c.b16 %v397, %v396
        %v423 = vpack.c.b16 %v399, %v398
        %v424 = vpack.c.b16 %v401, %v400
        %v425 = vpack.c.b16 %v403, %v402
        %v426 = vpack.c.b16 %v405, %v404
        %v427 = vpack.c.b16 %v407, %v406
        %v428 = vpack.c.b16 %v409, %v408
        %v429 = vpack.c.b16 %v411, %v410
        %v430 = vpack.c.b16 %v413, %v412
        %v431 = vpack.c.b16 %v415, %v414
        %v480 = vunpack.c.l.b16 %v308
        %v481 = vunpack.c.l.b16 %v309
        %v482 = vunpack.c.l.b16 %v310
        %v483 = vunpack.c.l.b16 %v311
        %v484 = vunpack.c.l.b16 %v312
        %v485 = vunpack.c.l.b16 %v313
        %v486 = vunpack.c.l.b16 %v314
        %v487 = vunpack.c.l.b16 %v315
        %v488 = vunpack.c.l.b16 %v316
        %v489 = vunpack.c.l.b16 %v317
        %v490 = vunpack.c.l.b16 %v318
        %v491 = vunpack.c.l.b16 %v319
        %v492 = vunpack.c.l.b16 %v320
        %v493 = vunpack.c.l.b16 %v321
        %v494 = vunpack.c.l.b16 %v322
        %v495 = vunpack.c.l.b16 %v323
        %v496 = vunpack.c.l.b16 %v324
        %v497 = vunpack.c.l.b16 %v325
        %v498 = vunpack.c.l.b16 %v326
        %v499 = vunpack.c.l.b16 %v327
        %v500 = vunpack.c.l.b16 %v328
        %v501 = vunpack.c.l.b16 %v329
        %v502 = vunpack.c.l.b16 %v330
        %v503 = vunpack.c.l.b16 %v331
        %v504 = vunpack.c.l.b16 %v332
        %v505 = vunpack.c.l.b16 %v333
        %v506 = vunpack.c.l.b16 %v334
        %v507 = vunpack.c.l.b16 %v335
        %v508 = vunpack.c.l.b16 %v336
        %v509 = vunpack.c.l.b16 %v337
        %v510 = vunpack.c.l.b16 %v338
        %v511 = vunpack.c.l.b16 %v339
        %v512 = vpack.c.b16 %v481, %v480
        %v513 = vpack.c.b16 %v483, %v482
        %v514 = vpack.c.b16 %v485, %v484
        %v515 = vpack.c.b16 %v487, %v486
        %v516 = vpack.c.b16 %v489, %v488
        %v517 = vpack.c.b16 %v491, %v490
        %v518 = vpack.c.b16 %v493, %v492
        %v519 = vpack.c.b16 %v495, %v494
        %v520 = vpack.c.b16 %v497, %v496
        %v521 = vpack.c.b16 %v499, %v498
        %v522 = vpack.c.b16 %v501, %v500
        %v523 = vpack.c.b16 %v503, %v502
        %v524 = vpack.c.b16 %v505, %v504
        %v525 = vpack.c.b16 %v507, %v506
        %v526 = vpack.c.b16 %v509, %v508
        %v527 = vpack.c.b16 %v511, %v510
        %544 = vmatprep.subr.bf16.mxu0 0
        %545 = vmatpush1.bf16.xpose.msra.mxu0 %v512
        %546 = vmatprep.subr.bf16.mxu0 0
        %547 = vmatpush1.bf16.xpose.msra.mxu0 %v513
        %548 = vmatprep.subr.bf16.mxu0 0
        %549 = vmatpush1.bf16.xpose.msra.mxu0 %v514
        %550 = vmatprep.subr.bf16.mxu0 0
        %551 = vmatpush1.bf16.xpose.msra.mxu0 %v515
        %552 = vmatprep.subr.bf16.mxu0 0
        %553 = vmatpush1.bf16.xpose.msra.mxu0 %v516
        %554 = vmatprep.subr.bf16.mxu0 0
        %555 = vmatpush1.bf16.xpose.msra.mxu0 %v517
        %556 = vmatprep.subr.bf16.mxu0 0
        %557 = vmatpush1.bf16.xpose.msra.mxu0 %v518
        %558 = vmatprep.subr.bf16.mxu0 0
        %559 = vmatpush1.bf16.xpose.msra.mxu0 %v519
        %560 = vmatprep.subr.bf16.mxu0 0
        %561 = vmatpush1.bf16.xpose.msra.mxu0 %v520
        %562 = vmatprep.subr.bf16.mxu0 0
        %563 = vmatpush1.bf16.xpose.msra.mxu0 %v521
        %564 = vmatprep.subr.bf16.mxu0 0
        %565 = vmatpush1.bf16.xpose.msra.mxu0 %v522
        %566 = vmatprep.subr.bf16.mxu0 0
        %567 = vmatpush1.bf16.xpose.msra.mxu0 %v523
        %568 = vmatprep.subr.bf16.mxu0 0
        %569 = vmatpush1.bf16.xpose.msra.mxu0 %v524
        %570 = vmatprep.subr.bf16.mxu0 0
        %571 = vmatpush1.bf16.xpose.msra.mxu0 %v525
        %572 = vmatprep.subr.bf16.mxu0 0
        %573 = vmatpush1.bf16.xpose.msra.mxu0 %v526
        %574 = vmatprep.subr.bf16.mxu0 0
        %575 = vmatpush1.bf16.xpose.msra.mxu0 %v527
        %576 = vmatprep.mubr.bf16.mxu0 0
        %577 = vmatmul.mubr.bf16.gmra.mrb[0].mxu0 %v416
        %v578 = vpop.f32.mrb[0].mxu0
        %v579 = vadd.f32 %v345, %v578
        %v580 = vpop.f32.mrb[0].mxu0
        %v581 = vadd.f32 %v349, %v580
        %v582 = vpop.f32.mrb[0].mxu0
        %v583 = vadd.f32 %v345, %v582
        %v584 = vpop.f32.mrb[0].mxu0
        %v585 = vadd.f32 %v349, %v584
        %586 = vmatprep.mubr.bf16.mxu0 0
        %587 = vmatmul.mubr.bf16.gmra.mrb[0].mxu0 %v417
        %v588 = vpop.f32.mrb[0].mxu0
        %v589 = vadd.f32 %v345, %v588
        %v590 = vpop.f32.mrb[0].mxu0
        %v591 = vadd.f32 %v349, %v590
        %v592 = vpop.f32.mrb[0].mxu0
        %v593 = vadd.f32 %v345, %v592
        %v594 = vpop.f32.mrb[0].mxu0
        %v595 = vadd.f32 %v349, %v594
        %596 = vmatprep.mubr.bf16.mxu0 0
        %597 = vmatmul.mubr.bf16.gmra.mrb[0].mxu0 %v418
        %v598 = vpop.f32.mrb[0].mxu0
        %v599 = vadd.f32 %v345, %v598
        %v600 = vpop.f32.mrb[0].mxu0
        %v601 = vadd.f32 %v349, %v600
        %v602 = vpop.f32.mrb[0].mxu0
        %v603 = vadd.f32 %v345, %v602
        %v604 = vpop.f32.mrb[0].mxu0
        %v605 = vadd.f32 %v349, %v604
        %606 = vmatprep.mubr.bf16.mxu0 0
        %607 = vmatmul.mubr.bf16.gmra.mrb[0].mxu0 %v419
        %v608 = vpop.f32.mrb[0].mxu0
        %v609 = vadd.f32 %v345, %v608
        %v610 = vpop.f32.mrb[0].mxu0
        %v611 = vadd.f32 %v349, %v610
        %v612 = vpop.f32.mrb[0].mxu0
        %v613 = vadd.f32 %v345, %v612
        %v614 = vpop.f32.mrb[0].mxu0
        %v615 = vadd.f32 %v349, %v614
        %616 = vmatprep.mubr.bf16.mxu0 0
        %617 = vmatmul.mubr.bf16.gmra.mrb[0].mxu0 %v420
        %v618 = vpop.f32.mrb[0].mxu0
        %v619 = vadd.f32 %v345, %v618
        %v620 = vpop.f32.mrb[0].mxu0
        %v621 = vadd.f32 %v349, %v620
        %v622 = vpop.f32.mrb[0].mxu0
        %v623 = vadd.f32 %v345, %v622
        %v624 = vpop.f32.mrb[0].mxu0
        %v625 = vadd.f32 %v349, %v624
        %626 = vmatprep.mubr.bf16.mxu0 0
        %627 = vmatmul.mubr.bf16.gmra.mrb[0].mxu0 %v421
        %v628 = vpop.f32.mrb[0].mxu0
        %v629 = vadd.f32 %v345, %v628
        %v630 = vpop.f32.mrb[0].mxu0
        %v631 = vadd.f32 %v349, %v630
        %v632 = vpop.f32.mrb[0].mxu0
        %v633 = vadd.f32 %v345, %v632
        %v634 = vpop.f32.mrb[0].mxu0
        %v635 = vadd.f32 %v349, %v634
        %636 = vmatprep.mubr.bf16.mxu0 0
        %637 = vmatmul.mubr.bf16.gmra.mrb[0].mxu0 %v422
        %v638 = vpop.f32.mrb[0].mxu0
        %v639 = vadd.f32 %v345, %v638
        %v640 = vpop.f32.mrb[0].mxu0
        %v641 = vadd.f32 %v349, %v640
        %v642 = vpop.f32.mrb[0].mxu0
        %v643 = vadd.f32 %v345, %v642
        %v644 = vpop.f32.mrb[0].mxu0
        %v645 = vadd.f32 %v349, %v644
        %646 = vmatprep.mubr.bf16.mxu0 0
        %647 = vmatmul.mubr.bf16.gmra.mrb[0].mxu0 %v423
        %v648 = vpop.f32.mrb[0].mxu0
        %v649 = vadd.f32 %v345, %v648
        %v650 = vpop.f32.mrb[0].mxu0
        %v651 = vadd.f32 %v349, %v650
        %v652 = vpop.f32.mrb[0].mxu0
        %v653 = vadd.f32 %v345, %v652
        %v654 = vpop.f32.mrb[0].mxu0
        %v655 = vadd.f32 %v349, %v654
        %656 = vmatprep.mubr.bf16.mxu0 0
        %657 = vmatmul.mubr.bf16.gmra.mrb[0].mxu0 %v424
        %v658 = vpop.f32.mrb[0].mxu0
        %v659 = vadd.f32 %v345, %v658
        %v660 = vpop.f32.mrb[0].mxu0
        %v661 = vadd.f32 %v349, %v660
        %v662 = vpop.f32.mrb[0].mxu0
        %v663 = vadd.f32 %v345, %v662
        %v664 = vpop.f32.mrb[0].mxu0
        %v665 = vadd.f32 %v349, %v664
        %666 = vmatprep.mubr.bf16.mxu0 0
        %667 = vmatmul.mubr.bf16.gmra.mrb[0].mxu0 %v425
        %v668 = vpop.f32.mrb[0].mxu0
        %v669 = vadd.f32 %v345, %v668
        %v670 = vpop.f32.mrb[0].mxu0
        %v671 = vadd.f32 %v349, %v670
        %v672 = vpop.f32.mrb[0].mxu0
        %v673 = vadd.f32 %v345, %v672
        %v674 = vpop.f32.mrb[0].mxu0
        %v675 = vadd.f32 %v349, %v674
        %676 = vmatprep.mubr.bf16.mxu0 0
        %677 = vmatmul.mubr.bf16.gmra.mrb[0].mxu0 %v426
        %v678 = vpop.f32.mrb[0].mxu0
        %v679 = vadd.f32 %v345, %v678
        %v680 = vpop.f32.mrb[0].mxu0
        %v681 = vadd.f32 %v349, %v680
        %v682 = vpop.f32.mrb[0].mxu0
        %v683 = vadd.f32 %v345, %v682
        %v684 = vpop.f32.mrb[0].mxu0
        %v685 = vadd.f32 %v349, %v684
        %686 = vmatprep.mubr.bf16.mxu0 0
        %687 = vmatmul.mubr.bf16.gmra.mrb[0].mxu0 %v427
        %v688 = vpop.f32.mrb[0].mxu0
        %v689 = vadd.f32 %v345, %v688
        %v690 = vpop.f32.mrb[0].mxu0
        %v691 = vadd.f32 %v349, %v690
        %v692 = vpop.f32.mrb[0].mxu0
        %v693 = vadd.f32 %v345, %v692
        %v694 = vpop.f32.mrb[0].mxu0
        %v695 = vadd.f32 %v349, %v694
        %696 = vmatprep.mubr.bf16.mxu0 0
        %697 = vmatmul.mubr.bf16.gmra.mrb[0].mxu0 %v428
        %v698 = vpop.f32.mrb[0].mxu0
        %v699 = vadd.f32 %v345, %v698
        %v700 = vpop.f32.mrb[0].mxu0
        %v701 = vadd.f32 %v349, %v700
        %v702 = vpop.f32.mrb[0].mxu0
        %v703 = vadd.f32 %v345, %v702
        %v704 = vpop.f32.mrb[0].mxu0
        %v705 = vadd.f32 %v349, %v704
        %706 = vmatprep.mubr.bf16.mxu0 0
        %707 = vmatmul.mubr.bf16.gmra.mrb[0].mxu0 %v429
        %v708 = vpop.f32.mrb[0].mxu0
        %v709 = vadd.f32 %v345, %v708
        %v710 = vpop.f32.mrb[0].mxu0
        %v711 = vadd.f32 %v349, %v710
        %v712 = vpop.f32.mrb[0].mxu0
        %v713 = vadd.f32 %v345, %v712
        %v714 = vpop.f32.mrb[0].mxu0
        %v715 = vadd.f32 %v349, %v714
        %716 = vmatprep.mubr.bf16.mxu0 0
        %717 = vmatmul.mubr.bf16.gmra.mrb[0].mxu0 %v430
        %v718 = vpop.f32.mrb[0].mxu0
        %v719 = vadd.f32 %v345, %v718
        %v720 = vpop.f32.mrb[0].mxu0
        %v721 = vadd.f32 %v349, %v720
        %v722 = vpop.f32.mrb[0].mxu0
        %v723 = vadd.f32 %v345, %v722
        %v724 = vpop.f32.mrb[0].mxu0
        %v725 = vadd.f32 %v349, %v724
        %726 = vmatprep.mubr.bf16.mxu0 0
        %727 = vmatmul.mubr.bf16.gmra.mrb[0].mxu0 %v431
        %v728 = vpop.f32.mrb[0].mxu0
        %v729 = vadd.f32 %v345, %v728
        %v730 = vpop.f32.mrb[0].mxu0
        %v731 = vadd.f32 %v349, %v730
        %v732 = vpop.f32.mrb[0].mxu0
        %v733 = vadd.f32 %v345, %v732
        %v734 = vpop.f32.mrb[0].mxu0
        %v735 = vadd.f32 %v349, %v734
        %736 = vdwg.mxu0
        %v737 = vlaneseq
        %v738 = vand.u32 %v737, 127
        %v739 = vadd.s32 %v738, 128
        %v740 = vmax.f32 %v579, %v581
        %741 = vmax.xlane.f32.xlu0 %v740
        %v742 = vpop.xlane.xlu0 %741
        %v743 = vmax.f32 %v583, %v585
        %744 = vmax.xlane.f32.xlu0 %v743
        %v745 = vpop.xlane.xlu0 %744
        %v746 = vmax.f32 %v589, %v591
        %747 = vmax.xlane.f32.xlu0 %v746
        %v748 = vpop.xlane.xlu0 %747
        %v749 = vmax.f32 %v593, %v595
        %750 = vmax.xlane.f32.xlu0 %v749
        %v751 = vpop.xlane.xlu0 %750
        %v752 = vmax.f32 %v599, %v601
        %753 = vmax.xlane.f32.xlu0 %v752
        %v754 = vpop.xlane.xlu0 %753
        %v755 = vmax.f32 %v603, %v605
        %756 = vmax.xlane.f32.xlu0 %v755
        %v757 = vpop.xlane.xlu0 %756
        %v758 = vmax.f32 %v609, %v611
        %759 = vmax.xlane.f32.xlu0 %v758
        %v760 = vpop.xlane.xlu0 %759
        %v761 = vmax.f32 %v613, %v615
        %762 = vmax.xlane.f32.xlu0 %v761
        %v763 = vpop.xlane.xlu0 %762
        %v764 = vmax.f32 %v619, %v621
        %765 = vmax.xlane.f32.xlu0 %v764
        %v766 = vpop.xlane.xlu0 %765
        %v767 = vmax.f32 %v623, %v625
        %768 = vmax.xlane.f32.xlu0 %v767
        %v769 = vpop.xlane.xlu0 %768
        %v770 = vmax.f32 %v629, %v631
        %771 = vmax.xlane.f32.xlu0 %v770
        %v772 = vpop.xlane.xlu0 %771
        %v773 = vmax.f32 %v633, %v635
        %774 = vmax.xlane.f32.xlu0 %v773
        %v775 = vpop.xlane.xlu0 %774
        %v776 = vmax.f32 %v639, %v641
        %777 = vmax.xlane.f32.xlu0 %v776
        %v778 = vpop.xlane.xlu0 %777
        %v779 = vmax.f32 %v643, %v645
        %780 = vmax.xlane.f32.xlu0 %v779
        %v781 = vpop.xlane.xlu0 %780
        %v782 = vmax.f32 %v649, %v651
        %783 = vmax.xlane.f32.xlu0 %v782
        %v784 = vpop.xlane.xlu0 %783
        %v785 = vmax.f32 %v653, %v655
        %786 = vmax.xlane.f32.xlu0 %v785
        %v787 = vpop.xlane.xlu0 %786
        %v788 = vmax.f32 %v659, %v661
        %789 = vmax.xlane.f32.xlu0 %v788
        %v790 = vpop.xlane.xlu0 %789
        %v791 = vmax.f32 %v663, %v665
        %792 = vmax.xlane.f32.xlu0 %v791
        %v793 = vpop.xlane.xlu0 %792
        %v794 = vmax.f32 %v669, %v671
        %795 = vmax.xlane.f32.xlu0 %v794
        %v796 = vpop.xlane.xlu0 %795
        %v797 = vmax.f32 %v673, %v675
        %798 = vmax.xlane.f32.xlu0 %v797
        %v799 = vpop.xlane.xlu0 %798
        %v800 = vmax.f32 %v679, %v681
        %801 = vmax.xlane.f32.xlu0 %v800
        %v802 = vpop.xlane.xlu0 %801
        %v803 = vmax.f32 %v683, %v685
        %804 = vmax.xlane.f32.xlu0 %v803
        %v805 = vpop.xlane.xlu0 %804
        %v806 = vmax.f32 %v689, %v691
        %807 = vmax.xlane.f32.xlu0 %v806
        %v808 = vpop.xlane.xlu0 %807
        %v809 = vmax.f32 %v693, %v695
        %810 = vmax.xlane.f32.xlu0 %v809
        %v811 = vpop.xlane.xlu0 %810
        %v812 = vmax.f32 %v699, %v701
        %813 = vmax.xlane.f32.xlu0 %v812
        %v814 = vpop.xlane.xlu0 %813
        %v815 = vmax.f32 %v703, %v705
        %816 = vmax.xlane.f32.xlu0 %v815
        %v817 = vpop.xlane.xlu0 %816
        %v818 = vmax.f32 %v709, %v711
        %819 = vmax.xlane.f32.xlu0 %v818
        %v820 = vpop.xlane.xlu0 %819
        %v821 = vmax.f32 %v713, %v715
        %822 = vmax.xlane.f32.xlu0 %v821
        %v823 = vpop.xlane.xlu0 %822
        %v824 = vmax.f32 %v719, %v721
        %825 = vmax.xlane.f32.xlu0 %v824
        %v826 = vpop.xlane.xlu0 %825
        %v827 = vmax.f32 %v723, %v725
        %828 = vmax.xlane.f32.xlu0 %v827
        %v829 = vpop.xlane.xlu0 %828
        %v830 = vmax.f32 %v729, %v731
        %831 = vmax.xlane.f32.xlu0 %v830
        %v832 = vpop.xlane.xlu0 %831
        %v833 = vmax.f32 %v733, %v735
        %834 = vmax.xlane.f32.xlu0 %v833
        %v835 = vpop.xlane.xlu0 %834
        %vm836 = vcmp.ge.f32.partialorder %v579, %v742
        %vm837 = vcmp.ge.f32.partialorder %v581, %v742
        %vm838 = vcmp.ge.f32.partialorder %v583, %v745
        %vm839 = vcmp.ge.f32.partialorder %v585, %v745
        %vm840 = vcmp.ge.f32.partialorder %v589, %v748
        %vm841 = vcmp.ge.f32.partialorder %v591, %v748
        %vm842 = vcmp.ge.f32.partialorder %v593, %v751
        %vm843 = vcmp.ge.f32.partialorder %v595, %v751
        %vm844 = vcmp.ge.f32.partialorder %v599, %v754
        %vm845 = vcmp.ge.f32.partialorder %v601, %v754
        %vm846 = vcmp.ge.f32.partialorder %v603, %v757
        %vm847 = vcmp.ge.f32.partialorder %v605, %v757
        %vm848 = vcmp.ge.f32.partialorder %v609, %v760
        %vm849 = vcmp.ge.f32.partialorder %v611, %v760
        %vm850 = vcmp.ge.f32.partialorder %v613, %v763
        %vm851 = vcmp.ge.f32.partialorder %v615, %v763
        %vm852 = vcmp.ge.f32.partialorder %v619, %v766
        %vm853 = vcmp.ge.f32.partialorder %v621, %v766
        %vm854 = vcmp.ge.f32.partialorder %v623, %v769
        %vm855 = vcmp.ge.f32.partialorder %v625, %v769
        %vm856 = vcmp.ge.f32.partialorder %v629, %v772
        %vm857 = vcmp.ge.f32.partialorder %v631, %v772
        %vm858 = vcmp.ge.f32.partialorder %v633, %v775
        %vm859 = vcmp.ge.f32.partialorder %v635, %v775
        %vm860 = vcmp.ge.f32.partialorder %v639, %v778
        %vm861 = vcmp.ge.f32.partialorder %v641, %v778
        %vm862 = vcmp.ge.f32.partialorder %v643, %v781
        %vm863 = vcmp.ge.f32.partialorder %v645, %v781
        %vm864 = vcmp.ge.f32.partialorder %v649, %v784
        %vm865 = vcmp.ge.f32.partialorder %v651, %v784
        %vm866 = vcmp.ge.f32.partialorder %v653, %v787
        %vm867 = vcmp.ge.f32.partialorder %v655, %v787
        %vm868 = vcmp.ge.f32.partialorder %v659, %v790
        %vm869 = vcmp.ge.f32.partialorder %v661, %v790
        %vm870 = vcmp.ge.f32.partialorder %v663, %v793
        %vm871 = vcmp.ge.f32.partialorder %v665, %v793
        %vm872 = vcmp.ge.f32.partialorder %v669, %v796
        %vm873 = vcmp.ge.f32.partialorder %v671, %v796
        %vm874 = vcmp.ge.f32.partialorder %v673, %v799
        %vm875 = vcmp.ge.f32.partialorder %v675, %v799
        %vm876 = vcmp.ge.f32.partialorder %v679, %v802
        %vm877 = vcmp.ge.f32.partialorder %v681, %v802
        %vm878 = vcmp.ge.f32.partialorder %v683, %v805
        %vm879 = vcmp.ge.f32.partialorder %v685, %v805
        %vm880 = vcmp.ge.f32.partialorder %v689, %v808
        %vm881 = vcmp.ge.f32.partialorder %v691, %v808
        %vm882 = vcmp.ge.f32.partialorder %v693, %v811
        %vm883 = vcmp.ge.f32.partialorder %v695, %v811
        %vm884 = vcmp.ge.f32.partialorder %v699, %v814
        %vm885 = vcmp.ge.f32.partialorder %v701, %v814
        %vm886 = vcmp.ge.f32.partialorder %v703, %v817
        %vm887 = vcmp.ge.f32.partialorder %v705, %v817
        %vm888 = vcmp.ge.f32.partialorder %v709, %v820
        %vm889 = vcmp.ge.f32.partialorder %v711, %v820
        %vm890 = vcmp.ge.f32.partialorder %v713, %v823
        %vm891 = vcmp.ge.f32.partialorder %v715, %v823
        %vm892 = vcmp.ge.f32.partialorder %v719, %v826
        %vm893 = vcmp.ge.f32.partialorder %v721, %v826
        %vm894 = vcmp.ge.f32.partialorder %v723, %v829
        %vm895 = vcmp.ge.f32.partialorder %v725, %v829
        %vm896 = vcmp.ge.f32.partialorder %v729, %v832
        %vm897 = vcmp.ge.f32.partialorder %v731, %v832
        %vm898 = vcmp.ge.f32.partialorder %v733, %v835
        %vm899 = vcmp.ge.f32.partialorder %v735, %v835
        %v900 = vsel %vm836, %v738, 256
        %v901 = vsel %vm837, %v739, 256
        %v902 = vsel %vm838, %v738, 256
        %v903 = vsel %vm839, %v739, 256
        %v904 = vsel %vm840, %v738, 256
        %v905 = vsel %vm841, %v739, 256
        %v906 = vsel %vm842, %v738, 256
        %v907 = vsel %vm843, %v739, 256
        %v908 = vsel %vm844, %v738, 256
        %v909 = vsel %vm845, %v739, 256
        %v910 = vsel %vm846, %v738, 256
        %v911 = vsel %vm847, %v739, 256
        %v912 = vsel %vm848, %v738, 256
        %v913 = vsel %vm849, %v739, 256
        %v914 = vsel %vm850, %v738, 256
        %v915 = vsel %vm851, %v739, 256
        %v916 = vsel %vm852, %v738, 256
        %v917 = vsel %vm853, %v739, 256
        %v918 = vsel %vm854, %v738, 256
        %v919 = vsel %vm855, %v739, 256
        %v920 = vsel %vm856, %v738, 256
        %v921 = vsel %vm857, %v739, 256
        %v922 = vsel %vm858, %v738, 256
        %v923 = vsel %vm859, %v739, 256
        %v924 = vsel %vm860, %v738, 256
        %v925 = vsel %vm861, %v739, 256
        %v926 = vsel %vm862, %v738, 256
        %v927 = vsel %vm863, %v739, 256
        %v928 = vsel %vm864, %v738, 256
        %v929 = vsel %vm865, %v739, 256
        %v930 = vsel %vm866, %v738, 256
        %v931 = vsel %vm867, %v739, 256
        %v932 = vsel %vm868, %v738, 256
        %v933 = vsel %vm869, %v739, 256
        %v934 = vsel %vm870, %v738, 256
        %v935 = vsel %vm871, %v739, 256
        %v936 = vsel %vm872, %v738, 256
        %v937 = vsel %vm873, %v739, 256
        %v938 = vsel %vm874, %v738, 256
        %v939 = vsel %vm875, %v739, 256
        %v940 = vsel %vm876, %v738, 256
        %v941 = vsel %vm877, %v739, 256
        %v942 = vsel %vm878, %v738, 256
        %v943 = vsel %vm879, %v739, 256
        %v944 = vsel %vm880, %v738, 256
        %v945 = vsel %vm881, %v739, 256
        %v946 = vsel %vm882, %v738, 256
        %v947 = vsel %vm883, %v739, 256
        %v948 = vsel %vm884, %v738, 256
        %v949 = vsel %vm885, %v739, 256
        %v950 = vsel %vm886, %v738, 256
        %v951 = vsel %vm887, %v739, 256
        %v952 = vsel %vm888, %v738, 256
        %v953 = vsel %vm889, %v739, 256
        %v954 = vsel %vm890, %v738, 256
        %v955 = vsel %vm891, %v739, 256
        %v956 = vsel %vm892, %v738, 256
        %v957 = vsel %vm893, %v739, 256
        %v958 = vsel %vm894, %v738, 256
        %v959 = vsel %vm895, %v739, 256
        %v960 = vsel %vm896, %v738, 256
        %v961 = vsel %vm897, %v739, 256
        %v962 = vsel %vm898, %v738, 256
        %v963 = vsel %vm899, %v739, 256
        %vm964 = vcmp.lt.s32.totalorder %v900, %v901
        %v965 = vsel %vm964, %v900, %v901
        %v966 = vand.u32 %v965, 65535
        %v967 = vshra.s32 %v965, 16
        %v968 = vcvt.s32.f32 %v966
        %v969 = vcvt.s32.f32 %v967
        %970 = vmin.xlane.f32.xlu0 %v969
        %v971 = vpop.xlane.xlu0 %970
        %vm972 = vcmp.eq.f32.partialorder %v969, %v971
        %v973 = vsel %vm972, %v968, inf
        %974 = vmin.xlane.f32.xlu0 %v973
        %v975 = vpop.xlane.xlu0 %974
        %v976 = vcvt.f32.s32 %v975
        %v977 = vcvt.f32.s32 %v971
        %v978 = vshll.u32 %v977, 16
        %v979 = vadd.s32 %v978, %v976
        %vm980 = vcmp.lt.s32.totalorder %v902, %v903
        %v981 = vsel %vm980, %v902, %v903
        %v982 = vand.u32 %v981, 65535
        %v983 = vshra.s32 %v981, 16
        %v984 = vcvt.s32.f32 %v982
        %v985 = vcvt.s32.f32 %v983
        %986 = vmin.xlane.f32.xlu0 %v985
        %v987 = vpop.xlane.xlu0 %986
        %vm988 = vcmp.eq.f32.partialorder %v985, %v987
        %v989 = vsel %vm988, %v984, inf
        %990 = vmin.xlane.f32.xlu0 %v989
        %v991 = vpop.xlane.xlu0 %990
        %v992 = vcvt.f32.s32 %v991
        %v993 = vcvt.f32.s32 %v987
        %v994 = vshll.u32 %v993, 16
        %v995 = vadd.s32 %v994, %v992
        %vm996 = vcmp.lt.s32.totalorder %v904, %v905
        %v997 = vsel %vm996, %v904, %v905
        %v998 = vand.u32 %v997, 65535
        %v999 = vshra.s32 %v997, 16
        %v1000 = vcvt.s32.f32 %v998
        %v1001 = vcvt.s32.f32 %v999
        %1002 = vmin.xlane.f32.xlu0 %v1001
        %v1003 = vpop.xlane.xlu0 %1002
        %vm1004 = vcmp.eq.f32.partialorder %v1001, %v1003
        %v1005 = vsel %vm1004, %v1000, inf
        %1006 = vmin.xlane.f32.xlu0 %v1005
        %v1007 = vpop.xlane.xlu0 %1006
        %v1008 = vcvt.f32.s32 %v1007
        %v1009 = vcvt.f32.s32 %v1003
        %v1010 = vshll.u32 %v1009, 16
        %v1011 = vadd.s32 %v1010, %v1008
        %vm1012 = vcmp.lt.s32.totalorder %v906, %v907
        %v1013 = vsel %vm1012, %v906, %v907
        %v1014 = vand.u32 %v1013, 65535
        %v1015 = vshra.s32 %v1013, 16
        %v1016 = vcvt.s32.f32 %v1014
        %v1017 = vcvt.s32.f32 %v1015
        %1018 = vmin.xlane.f32.xlu0 %v1017
        %v1019 = vpop.xlane.xlu0 %1018
        %vm1020 = vcmp.eq.f32.partialorder %v1017, %v1019
        %v1021 = vsel %vm1020, %v1016, inf
        %1022 = vmin.xlane.f32.xlu0 %v1021
        %v1023 = vpop.xlane.xlu0 %1022
        %v1024 = vcvt.f32.s32 %v1023
        %v1025 = vcvt.f32.s32 %v1019
        %v1026 = vshll.u32 %v1025, 16
        %v1027 = vadd.s32 %v1026, %v1024
        %vm1028 = vcmp.lt.s32.totalorder %v908, %v909
        %v1029 = vsel %vm1028, %v908, %v909
        %v1030 = vand.u32 %v1029, 65535
        %v1031 = vshra.s32 %v1029, 16
        %v1032 = vcvt.s32.f32 %v1030
        %v1033 = vcvt.s32.f32 %v1031
        %1034 = vmin.xlane.f32.xlu0 %v1033
        %v1035 = vpop.xlane.xlu0 %1034
        %vm1036 = vcmp.eq.f32.partialorder %v1033, %v1035
        %v1037 = vsel %vm1036, %v1032, inf
        %1038 = vmin.xlane.f32.xlu0 %v1037
        %v1039 = vpop.xlane.xlu0 %1038
        %v1040 = vcvt.f32.s32 %v1039
        %v1041 = vcvt.f32.s32 %v1035
        %v1042 = vshll.u32 %v1041, 16
        %v1043 = vadd.s32 %v1042, %v1040
        %vm1044 = vcmp.lt.s32.totalorder %v910, %v911
        %v1045 = vsel %vm1044, %v910, %v911
        %v1046 = vand.u32 %v1045, 65535
        %v1047 = vshra.s32 %v1045, 16
        %v1048 = vcvt.s32.f32 %v1046
        %v1049 = vcvt.s32.f32 %v1047
        %1050 = vmin.xlane.f32.xlu0 %v1049
        %v1051 = vpop.xlane.xlu0 %1050
        %vm1052 = vcmp.eq.f32.partialorder %v1049, %v1051
        %v1053 = vsel %vm1052, %v1048, inf
        %1054 = vmin.xlane.f32.xlu0 %v1053
        %v1055 = vpop.xlane.xlu0 %1054
        %v1056 = vcvt.f32.s32 %v1055
        %v1057 = vcvt.f32.s32 %v1051
        %v1058 = vshll.u32 %v1057, 16
        %v1059 = vadd.s32 %v1058, %v1056
        %vm1060 = vcmp.lt.s32.totalorder %v912, %v913
        %v1061 = vsel %vm1060, %v912, %v913
        %v1062 = vand.u32 %v1061, 65535
        %v1063 = vshra.s32 %v1061, 16
        %v1064 = vcvt.s32.f32 %v1062
        %v1065 = vcvt.s32.f32 %v1063
        %1066 = vmin.xlane.f32.xlu0 %v1065
        %v1067 = vpop.xlane.xlu0 %1066
        %vm1068 = vcmp.eq.f32.partialorder %v1065, %v1067
        %v1069 = vsel %vm1068, %v1064, inf
        %1070 = vmin.xlane.f32.xlu0 %v1069
        %v1071 = vpop.xlane.xlu0 %1070
        %v1072 = vcvt.f32.s32 %v1071
        %v1073 = vcvt.f32.s32 %v1067
        %v1074 = vshll.u32 %v1073, 16
        %v1075 = vadd.s32 %v1074, %v1072
        %vm1076 = vcmp.lt.s32.totalorder %v914, %v915
        %v1077 = vsel %vm1076, %v914, %v915
        %v1078 = vand.u32 %v1077, 65535
        %v1079 = vshra.s32 %v1077, 16
        %v1080 = vcvt.s32.f32 %v1078
        %v1081 = vcvt.s32.f32 %v1079
        %1082 = vmin.xlane.f32.xlu0 %v1081
        %v1083 = vpop.xlane.xlu0 %1082
        %vm1084 = vcmp.eq.f32.partialorder %v1081, %v1083
        %v1085 = vsel %vm1084, %v1080, inf
        %1086 = vmin.xlane.f32.xlu0 %v1085
        %v1087 = vpop.xlane.xlu0 %1086
        %v1088 = vcvt.f32.s32 %v1087
        %v1089 = vcvt.f32.s32 %v1083
        %v1090 = vshll.u32 %v1089, 16
        %v1091 = vadd.s32 %v1090, %v1088
        %vm1092 = vcmp.lt.s32.totalorder %v916, %v917
        %v1093 = vsel %vm1092, %v916, %v917
        %v1094 = vand.u32 %v1093, 65535
        %v1095 = vshra.s32 %v1093, 16
        %v1096 = vcvt.s32.f32 %v1094
        %v1097 = vcvt.s32.f32 %v1095
        %1098 = vmin.xlane.f32.xlu0 %v1097
        %v1099 = vpop.xlane.xlu0 %1098
        %vm1100 = vcmp.eq.f32.partialorder %v1097, %v1099
        %v1101 = vsel %vm1100, %v1096, inf
        %1102 = vmin.xlane.f32.xlu0 %v1101
        %v1103 = vpop.xlane.xlu0 %1102
        %v1104 = vcvt.f32.s32 %v1103
        %v1105 = vcvt.f32.s32 %v1099
        %v1106 = vshll.u32 %v1105, 16
        %v1107 = vadd.s32 %v1106, %v1104
        %vm1108 = vcmp.lt.s32.totalorder %v918, %v919
        %v1109 = vsel %vm1108, %v918, %v919
        %v1110 = vand.u32 %v1109, 65535
        %v1111 = vshra.s32 %v1109, 16
        %v1112 = vcvt.s32.f32 %v1110
        %v1113 = vcvt.s32.f32 %v1111
        %1114 = vmin.xlane.f32.xlu0 %v1113
        %v1115 = vpop.xlane.xlu0 %1114
        %vm1116 = vcmp.eq.f32.partialorder %v1113, %v1115
        %v1117 = vsel %vm1116, %v1112, inf
        %1118 = vmin.xlane.f32.xlu0 %v1117
        %v1119 = vpop.xlane.xlu0 %1118
        %v1120 = vcvt.f32.s32 %v1119
        %v1121 = vcvt.f32.s32 %v1115
        %v1122 = vshll.u32 %v1121, 16
        %v1123 = vadd.s32 %v1122, %v1120
        %vm1124 = vcmp.lt.s32.totalorder %v920, %v921
        %v1125 = vsel %vm1124, %v920, %v921
        %v1126 = vand.u32 %v1125, 65535
        %v1127 = vshra.s32 %v1125, 16
        %v1128 = vcvt.s32.f32 %v1126
        %v1129 = vcvt.s32.f32 %v1127
        %1130 = vmin.xlane.f32.xlu0 %v1129
        %v1131 = vpop.xlane.xlu0 %1130
        %vm1132 = vcmp.eq.f32.partialorder %v1129, %v1131
        %v1133 = vsel %vm1132, %v1128, inf
        %1134 = vmin.xlane.f32.xlu0 %v1133
        %v1135 = vpop.xlane.xlu0 %1134
        %v1136 = vcvt.f32.s32 %v1135
        %v1137 = vcvt.f32.s32 %v1131
        %v1138 = vshll.u32 %v1137, 16
        %v1139 = vadd.s32 %v1138, %v1136
        %vm1140 = vcmp.lt.s32.totalorder %v922, %v923
        %v1141 = vsel %vm1140, %v922, %v923
        %v1142 = vand.u32 %v1141, 65535
        %v1143 = vshra.s32 %v1141, 16
        %v1144 = vcvt.s32.f32 %v1142
        %v1145 = vcvt.s32.f32 %v1143
        %1146 = vmin.xlane.f32.xlu0 %v1145
        %v1147 = vpop.xlane.xlu0 %1146
        %vm1148 = vcmp.eq.f32.partialorder %v1145, %v1147
        %v1149 = vsel %vm1148, %v1144, inf
        %1150 = vmin.xlane.f32.xlu0 %v1149
        %v1151 = vpop.xlane.xlu0 %1150
        %v1152 = vcvt.f32.s32 %v1151
        %v1153 = vcvt.f32.s32 %v1147
        %v1154 = vshll.u32 %v1153, 16
        %v1155 = vadd.s32 %v1154, %v1152
        %vm1156 = vcmp.lt.s32.totalorder %v924, %v925
        %v1157 = vsel %vm1156, %v924, %v925
        %v1158 = vand.u32 %v1157, 65535
        %v1159 = vshra.s32 %v1157, 16
        %v1160 = vcvt.s32.f32 %v1158
        %v1161 = vcvt.s32.f32 %v1159
        %1162 = vmin.xlane.f32.xlu0 %v1161
        %v1163 = vpop.xlane.xlu0 %1162
        %vm1164 = vcmp.eq.f32.partialorder %v1161, %v1163
        %v1165 = vsel %vm1164, %v1160, inf
        %1166 = vmin.xlane.f32.xlu0 %v1165
        %v1167 = vpop.xlane.xlu0 %1166
        %v1168 = vcvt.f32.s32 %v1167
        %v1169 = vcvt.f32.s32 %v1163
        %v1170 = vshll.u32 %v1169, 16
        %v1171 = vadd.s32 %v1170, %v1168
        %vm1172 = vcmp.lt.s32.totalorder %v926, %v927
        %v1173 = vsel %vm1172, %v926, %v927
        %v1174 = vand.u32 %v1173, 65535
        %v1175 = vshra.s32 %v1173, 16
        %v1176 = vcvt.s32.f32 %v1174
        %v1177 = vcvt.s32.f32 %v1175
        %1178 = vmin.xlane.f32.xlu0 %v1177
        %v1179 = vpop.xlane.xlu0 %1178
        %vm1180 = vcmp.eq.f32.partialorder %v1177, %v1179
        %v1181 = vsel %vm1180, %v1176, inf
        %1182 = vmin.xlane.f32.xlu0 %v1181
        %v1183 = vpop.xlane.xlu0 %1182
        %v1184 = vcvt.f32.s32 %v1183
        %v1185 = vcvt.f32.s32 %v1179
        %v1186 = vshll.u32 %v1185, 16
        %v1187 = vadd.s32 %v1186, %v1184
        %vm1188 = vcmp.lt.s32.totalorder %v928, %v929
        %v1189 = vsel %vm1188, %v928, %v929
        %v1190 = vand.u32 %v1189, 65535
        %v1191 = vshra.s32 %v1189, 16
        %v1192 = vcvt.s32.f32 %v1190
        %v1193 = vcvt.s32.f32 %v1191
        %1194 = vmin.xlane.f32.xlu0 %v1193
        %v1195 = vpop.xlane.xlu0 %1194
        %vm1196 = vcmp.eq.f32.partialorder %v1193, %v1195
        %v1197 = vsel %vm1196, %v1192, inf
        %1198 = vmin.xlane.f32.xlu0 %v1197
        %v1199 = vpop.xlane.xlu0 %1198
        %v1200 = vcvt.f32.s32 %v1199
        %v1201 = vcvt.f32.s32 %v1195
        %v1202 = vshll.u32 %v1201, 16
        %v1203 = vadd.s32 %v1202, %v1200
        %vm1204 = vcmp.lt.s32.totalorder %v930, %v931
        %v1205 = vsel %vm1204, %v930, %v931
        %v1206 = vand.u32 %v1205, 65535
        %v1207 = vshra.s32 %v1205, 16
        %v1208 = vcvt.s32.f32 %v1206
        %v1209 = vcvt.s32.f32 %v1207
        %1210 = vmin.xlane.f32.xlu0 %v1209
        %v1211 = vpop.xlane.xlu0 %1210
        %vm1212 = vcmp.eq.f32.partialorder %v1209, %v1211
        %v1213 = vsel %vm1212, %v1208, inf
        %1214 = vmin.xlane.f32.xlu0 %v1213
        %v1215 = vpop.xlane.xlu0 %1214
        %v1216 = vcvt.f32.s32 %v1215
        %v1217 = vcvt.f32.s32 %v1211
        %v1218 = vshll.u32 %v1217, 16
        %v1219 = vadd.s32 %v1218, %v1216
        %vm1220 = vcmp.lt.s32.totalorder %v932, %v933
        %v1221 = vsel %vm1220, %v932, %v933
        %v1222 = vand.u32 %v1221, 65535
        %v1223 = vshra.s32 %v1221, 16
        %v1224 = vcvt.s32.f32 %v1222
        %v1225 = vcvt.s32.f32 %v1223
        %1226 = vmin.xlane.f32.xlu0 %v1225
        %v1227 = vpop.xlane.xlu0 %1226
        %vm1228 = vcmp.eq.f32.partialorder %v1225, %v1227
        %v1229 = vsel %vm1228, %v1224, inf
        %1230 = vmin.xlane.f32.xlu0 %v1229
        %v1231 = vpop.xlane.xlu0 %1230
        %v1232 = vcvt.f32.s32 %v1231
        %v1233 = vcvt.f32.s32 %v1227
        %v1234 = vshll.u32 %v1233, 16
        %v1235 = vadd.s32 %v1234, %v1232
        %vm1236 = vcmp.lt.s32.totalorder %v934, %v935
        %v1237 = vsel %vm1236, %v934, %v935
        %v1238 = vand.u32 %v1237, 65535
        %v1239 = vshra.s32 %v1237, 16
        %v1240 = vcvt.s32.f32 %v1238
        %v1241 = vcvt.s32.f32 %v1239
        %1242 = vmin.xlane.f32.xlu0 %v1241
        %v1243 = vpop.xlane.xlu0 %1242
        %vm1244 = vcmp.eq.f32.partialorder %v1241, %v1243
        %v1245 = vsel %vm1244, %v1240, inf
        %1246 = vmin.xlane.f32.xlu0 %v1245
        %v1247 = vpop.xlane.xlu0 %1246
        %v1248 = vcvt.f32.s32 %v1247
        %v1249 = vcvt.f32.s32 %v1243
        %v1250 = vshll.u32 %v1249, 16
        %v1251 = vadd.s32 %v1250, %v1248
        %vm1252 = vcmp.lt.s32.totalorder %v936, %v937
        %v1253 = vsel %vm1252, %v936, %v937
        %v1254 = vand.u32 %v1253, 65535
        %v1255 = vshra.s32 %v1253, 16
        %v1256 = vcvt.s32.f32 %v1254
        %v1257 = vcvt.s32.f32 %v1255
        %1258 = vmin.xlane.f32.xlu0 %v1257
        %v1259 = vpop.xlane.xlu0 %1258
        %vm1260 = vcmp.eq.f32.partialorder %v1257, %v1259
        %v1261 = vsel %vm1260, %v1256, inf
        %1262 = vmin.xlane.f32.xlu0 %v1261
        %v1263 = vpop.xlane.xlu0 %1262
        %v1264 = vcvt.f32.s32 %v1263
        %v1265 = vcvt.f32.s32 %v1259
        %v1266 = vshll.u32 %v1265, 16
        %v1267 = vadd.s32 %v1266, %v1264
        %vm1268 = vcmp.lt.s32.totalorder %v938, %v939
        %v1269 = vsel %vm1268, %v938, %v939
        %v1270 = vand.u32 %v1269, 65535
        %v1271 = vshra.s32 %v1269, 16
        %v1272 = vcvt.s32.f32 %v1270
        %v1273 = vcvt.s32.f32 %v1271
        %1274 = vmin.xlane.f32.xlu0 %v1273
        %v1275 = vpop.xlane.xlu0 %1274
        %vm1276 = vcmp.eq.f32.partialorder %v1273, %v1275
        %v1277 = vsel %vm1276, %v1272, inf
        %1278 = vmin.xlane.f32.xlu0 %v1277
        %v1279 = vpop.xlane.xlu0 %1278
        %v1280 = vcvt.f32.s32 %v1279
        %v1281 = vcvt.f32.s32 %v1275
        %v1282 = vshll.u32 %v1281, 16
        %v1283 = vadd.s32 %v1282, %v1280
        %vm1284 = vcmp.lt.s32.totalorder %v940, %v941
        %v1285 = vsel %vm1284, %v940, %v941
        %v1286 = vand.u32 %v1285, 65535
        %v1287 = vshra.s32 %v1285, 16
        %v1288 = vcvt.s32.f32 %v1286
        %v1289 = vcvt.s32.f32 %v1287
        %1290 = vmin.xlane.f32.xlu0 %v1289
        %v1291 = vpop.xlane.xlu0 %1290
        %vm1292 = vcmp.eq.f32.partialorder %v1289, %v1291
        %v1293 = vsel %vm1292, %v1288, inf
        %1294 = vmin.xlane.f32.xlu0 %v1293
        %v1295 = vpop.xlane.xlu0 %1294
        %v1296 = vcvt.f32.s32 %v1295
        %v1297 = vcvt.f32.s32 %v1291
        %v1298 = vshll.u32 %v1297, 16
        %v1299 = vadd.s32 %v1298, %v1296
        %vm1300 = vcmp.lt.s32.totalorder %v942, %v943
        %v1301 = vsel %vm1300, %v942, %v943
        %v1302 = vand.u32 %v1301, 65535
        %v1303 = vshra.s32 %v1301, 16
        %v1304 = vcvt.s32.f32 %v1302
        %v1305 = vcvt.s32.f32 %v1303
        %1306 = vmin.xlane.f32.xlu0 %v1305
        %v1307 = vpop.xlane.xlu0 %1306
        %vm1308 = vcmp.eq.f32.partialorder %v1305, %v1307
        %v1309 = vsel %vm1308, %v1304, inf
        %1310 = vmin.xlane.f32.xlu0 %v1309
        %v1311 = vpop.xlane.xlu0 %1310
        %v1312 = vcvt.f32.s32 %v1311
        %v1313 = vcvt.f32.s32 %v1307
        %v1314 = vshll.u32 %v1313, 16
        %v1315 = vadd.s32 %v1314, %v1312
        %vm1316 = vcmp.lt.s32.totalorder %v944, %v945
        %v1317 = vsel %vm1316, %v944, %v945
        %v1318 = vand.u32 %v1317, 65535
        %v1319 = vshra.s32 %v1317, 16
        %v1320 = vcvt.s32.f32 %v1318
        %v1321 = vcvt.s32.f32 %v1319
        %1322 = vmin.xlane.f32.xlu0 %v1321
        %v1323 = vpop.xlane.xlu0 %1322
        %vm1324 = vcmp.eq.f32.partialorder %v1321, %v1323
        %v1325 = vsel %vm1324, %v1320, inf
        %1326 = vmin.xlane.f32.xlu0 %v1325
        %v1327 = vpop.xlane.xlu0 %1326
        %v1328 = vcvt.f32.s32 %v1327
        %v1329 = vcvt.f32.s32 %v1323
        %v1330 = vshll.u32 %v1329, 16
        %v1331 = vadd.s32 %v1330, %v1328
        %vm1332 = vcmp.lt.s32.totalorder %v946, %v947
        %v1333 = vsel %vm1332, %v946, %v947
        %v1334 = vand.u32 %v1333, 65535
        %v1335 = vshra.s32 %v1333, 16
        %v1336 = vcvt.s32.f32 %v1334
        %v1337 = vcvt.s32.f32 %v1335
        %1338 = vmin.xlane.f32.xlu0 %v1337
        %v1339 = vpop.xlane.xlu0 %1338
        %vm1340 = vcmp.eq.f32.partialorder %v1337, %v1339
        %v1341 = vsel %vm1340, %v1336, inf
        %1342 = vmin.xlane.f32.xlu0 %v1341
        %v1343 = vpop.xlane.xlu0 %1342
        %v1344 = vcvt.f32.s32 %v1343
        %v1345 = vcvt.f32.s32 %v1339
        %v1346 = vshll.u32 %v1345, 16
        %v1347 = vadd.s32 %v1346, %v1344
        %vm1348 = vcmp.lt.s32.totalorder %v948, %v949
        %v1349 = vsel %vm1348, %v948, %v949
        %v1350 = vand.u32 %v1349, 65535
        %v1351 = vshra.s32 %v1349, 16
        %v1352 = vcvt.s32.f32 %v1350
        %v1353 = vcvt.s32.f32 %v1351
        %1354 = vmin.xlane.f32.xlu0 %v1353
        %v1355 = vpop.xlane.xlu0 %1354
        %vm1356 = vcmp.eq.f32.partialorder %v1353, %v1355
        %v1357 = vsel %vm1356, %v1352, inf
        %1358 = vmin.xlane.f32.xlu0 %v1357
        %v1359 = vpop.xlane.xlu0 %1358
        %v1360 = vcvt.f32.s32 %v1359
        %v1361 = vcvt.f32.s32 %v1355
        %v1362 = vshll.u32 %v1361, 16
        %v1363 = vadd.s32 %v1362, %v1360
        %vm1364 = vcmp.lt.s32.totalorder %v950, %v951
        %v1365 = vsel %vm1364, %v950, %v951
        %v1366 = vand.u32 %v1365, 65535
        %v1367 = vshra.s32 %v1365, 16
        %v1368 = vcvt.s32.f32 %v1366
        %v1369 = vcvt.s32.f32 %v1367
        %1370 = vmin.xlane.f32.xlu0 %v1369
        %v1371 = vpop.xlane.xlu0 %1370
        %vm1372 = vcmp.eq.f32.partialorder %v1369, %v1371
        %v1373 = vsel %vm1372, %v1368, inf
        %1374 = vmin.xlane.f32.xlu0 %v1373
        %v1375 = vpop.xlane.xlu0 %1374
        %v1376 = vcvt.f32.s32 %v1375
        %v1377 = vcvt.f32.s32 %v1371
        %v1378 = vshll.u32 %v1377, 16
        %v1379 = vadd.s32 %v1378, %v1376
        %vm1380 = vcmp.lt.s32.totalorder %v952, %v953
        %v1381 = vsel %vm1380, %v952, %v953
        %v1382 = vand.u32 %v1381, 65535
        %v1383 = vshra.s32 %v1381, 16
        %v1384 = vcvt.s32.f32 %v1382
        %v1385 = vcvt.s32.f32 %v1383
        %1386 = vmin.xlane.f32.xlu0 %v1385
        %v1387 = vpop.xlane.xlu0 %1386
        %vm1388 = vcmp.eq.f32.partialorder %v1385, %v1387
        %v1389 = vsel %vm1388, %v1384, inf
        %1390 = vmin.xlane.f32.xlu0 %v1389
        %v1391 = vpop.xlane.xlu0 %1390
        %v1392 = vcvt.f32.s32 %v1391
        %v1393 = vcvt.f32.s32 %v1387
        %v1394 = vshll.u32 %v1393, 16
        %v1395 = vadd.s32 %v1394, %v1392
        %vm1396 = vcmp.lt.s32.totalorder %v954, %v955
        %v1397 = vsel %vm1396, %v954, %v955
        %v1398 = vand.u32 %v1397, 65535
        %v1399 = vshra.s32 %v1397, 16
        %v1400 = vcvt.s32.f32 %v1398
        %v1401 = vcvt.s32.f32 %v1399
        %1402 = vmin.xlane.f32.xlu0 %v1401
        %v1403 = vpop.xlane.xlu0 %1402
        %vm1404 = vcmp.eq.f32.partialorder %v1401, %v1403
        %v1405 = vsel %vm1404, %v1400, inf
        %1406 = vmin.xlane.f32.xlu0 %v1405
        %v1407 = vpop.xlane.xlu0 %1406
        %v1408 = vcvt.f32.s32 %v1407
        %v1409 = vcvt.f32.s32 %v1403
        %v1410 = vshll.u32 %v1409, 16
        %v1411 = vadd.s32 %v1410, %v1408
        %vm1412 = vcmp.lt.s32.totalorder %v956, %v957
        %v1413 = vsel %vm1412, %v956, %v957
        %v1414 = vand.u32 %v1413, 65535
        %v1415 = vshra.s32 %v1413, 16
        %v1416 = vcvt.s32.f32 %v1414
        %v1417 = vcvt.s32.f32 %v1415
        %1418 = vmin.xlane.f32.xlu0 %v1417
        %v1419 = vpop.xlane.xlu0 %1418
        %vm1420 = vcmp.eq.f32.partialorder %v1417, %v1419
        %v1421 = vsel %vm1420, %v1416, inf
        %1422 = vmin.xlane.f32.xlu0 %v1421
        %v1423 = vpop.xlane.xlu0 %1422
        %v1424 = vcvt.f32.s32 %v1423
        %v1425 = vcvt.f32.s32 %v1419
        %v1426 = vshll.u32 %v1425, 16
        %v1427 = vadd.s32 %v1426, %v1424
        %vm1428 = vcmp.lt.s32.totalorder %v958, %v959
        %v1429 = vsel %vm1428, %v958, %v959
        %v1430 = vand.u32 %v1429, 65535
        %v1431 = vshra.s32 %v1429, 16
        %v1432 = vcvt.s32.f32 %v1430
        %v1433 = vcvt.s32.f32 %v1431
        %1434 = vmin.xlane.f32.xlu0 %v1433
        %v1435 = vpop.xlane.xlu0 %1434
        %vm1436 = vcmp.eq.f32.partialorder %v1433, %v1435
        %v1437 = vsel %vm1436, %v1432, inf
        %1438 = vmin.xlane.f32.xlu0 %v1437
        %v1439 = vpop.xlane.xlu0 %1438
        %v1440 = vcvt.f32.s32 %v1439
        %v1441 = vcvt.f32.s32 %v1435
        %v1442 = vshll.u32 %v1441, 16
        %v1443 = vadd.s32 %v1442, %v1440
        %vm1444 = vcmp.lt.s32.totalorder %v960, %v961
        %v1445 = vsel %vm1444, %v960, %v961
        %v1446 = vand.u32 %v1445, 65535
        %v1447 = vshra.s32 %v1445, 16
        %v1448 = vcvt.s32.f32 %v1446
        %v1449 = vcvt.s32.f32 %v1447
        %1450 = vmin.xlane.f32.xlu0 %v1449
        %v1451 = vpop.xlane.xlu0 %1450
        %vm1452 = vcmp.eq.f32.partialorder %v1449, %v1451
        %v1453 = vsel %vm1452, %v1448, inf
        %1454 = vmin.xlane.f32.xlu0 %v1453
        %v1455 = vpop.xlane.xlu0 %1454
        %v1456 = vcvt.f32.s32 %v1455
        %v1457 = vcvt.f32.s32 %v1451
        %v1458 = vshll.u32 %v1457, 16
        %v1459 = vadd.s32 %v1458, %v1456
        %vm1460 = vcmp.lt.s32.totalorder %v962, %v963
        %v1461 = vsel %vm1460, %v962, %v963
        %v1462 = vand.u32 %v1461, 65535
        %v1463 = vshra.s32 %v1461, 16
        %v1464 = vcvt.s32.f32 %v1462
        %v1465 = vcvt.s32.f32 %v1463
        %1466 = vmin.xlane.f32.xlu0 %v1465
        %v1467 = vpop.xlane.xlu0 %1466
        %vm1468 = vcmp.eq.f32.partialorder %v1465, %v1467
        %v1469 = vsel %vm1468, %v1464, inf
        %1470 = vmin.xlane.f32.xlu0 %v1469
        %v1471 = vpop.xlane.xlu0 %1470
        %v1472 = vcvt.f32.s32 %v1471
        %v1473 = vcvt.f32.s32 %v1467
        %v1474 = vshll.u32 %v1473, 16
        %v1475 = vadd.s32 %v1474, %v1472
        %vm1476 = vcmask 7168
        %1477 = vst.msk [vmem:[%s230] sm:$0xff] %vm1476, %v979
        %1478 = vst.msk [vmem:[%s230 + $0x8] sm:$0xff] %vm1476, %v995
        %1479 = vst.msk [vmem:[%s230 + $0x10] sm:$0xff] %vm1476, %v1011
        %1480 = vst.msk [vmem:[%s230 + $0x18] sm:$0xff] %vm1476, %v1027
        %1481 = vst.msk [vmem:[%s230 + $0x20] sm:$0xff] %vm1476, %v1043
        %1482 = vst.msk [vmem:[%s230 + $0x28] sm:$0xff] %vm1476, %v1059
        %1483 = vst.msk [vmem:[%s230 + $0x30] sm:$0xff] %vm1476, %v1075
        %1484 = vst.msk [vmem:[%s230 + $0x38] sm:$0xff] %vm1476, %v1091
        %1485 = vst.msk [vmem:[%s230 + $0x40] sm:$0xff] %vm1476, %v1107
        %1486 = vst.msk [vmem:[%s230 + $0x48] sm:$0xff] %vm1476, %v1123
        %1487 = vst.msk [vmem:[%s230 + $0x50] sm:$0xff] %vm1476, %v1139
        %1488 = vst.msk [vmem:[%s230 + $0x58] sm:$0xff] %vm1476, %v1155
        %1489 = vst.msk [vmem:[%s230 + $0x60] sm:$0xff] %vm1476, %v1171
        %1490 = vst.msk [vmem:[%s230 + $0x68] sm:$0xff] %vm1476, %v1187
        %1491 = vst.msk [vmem:[%s230 + $0x70] sm:$0xff] %vm1476, %v1203
        %1492 = vst.msk [vmem:[%s230 + $0x78] sm:$0xff] %vm1476, %v1219
        %1493 = vst.msk [vmem:[%s230 + $0x80] sm:$0xff] %vm1476, %v1235
        %1494 = vst.msk [vmem:[%s230 + $0x88] sm:$0xff] %vm1476, %v1251
        %1495 = vst.msk [vmem:[%s230 + $0x90] sm:$0xff] %vm1476, %v1267
        %1496 = vst.msk [vmem:[%s230 + $0x98] sm:$0xff] %vm1476, %v1283
        %1497 = vst.msk [vmem:[%s230 + $0xa0] sm:$0xff] %vm1476, %v1299
        %1498 = vst.msk [vmem:[%s230 + $0xa8] sm:$0xff] %vm1476, %v1315
        %1499 = vst.msk [vmem:[%s230 + $0xb0] sm:$0xff] %vm1476, %v1331
        %1500 = vst.msk [vmem:[%s230 + $0xb8] sm:$0xff] %vm1476, %v1347
        %1501 = vst.msk [vmem:[%s230 + $0xc0] sm:$0xff] %vm1476, %v1363
        %1502 = vst.msk [vmem:[%s230 + $0xc8] sm:$0xff] %vm1476, %v1379
        %1503 = vst.msk [vmem:[%s230 + $0xd0] sm:$0xff] %vm1476, %v1395
        %1504 = vst.msk [vmem:[%s230 + $0xd8] sm:$0xff] %vm1476, %v1411
        %1505 = vst.msk [vmem:[%s230 + $0xe0] sm:$0xff] %vm1476, %v1427
        %1506 = vst.msk [vmem:[%s230 + $0xe8] sm:$0xff] %vm1476, %v1443
        %1507 = vst.msk [vmem:[%s230 + $0xf0] sm:$0xff] %vm1476, %v1459
        %1508 = vst.msk [vmem:[%s230 + $0xf8] sm:$0xff] %vm1476, %v1475
      $region40: #{ipsr_forward.1} parent=31 // pred_fallthru
        _
      %s1509 = smul.u32 32, %s21
      %p1510 = scmp.lt.s32.totalorder %s20, 1
      %s1511 = scalar_select %p1510, %s20, 1
      %p1512 = scmp.lt.s32.totalorder %s1509, 31
      %s1513 = scalar_select %p1512, %s1509, 31
      %s1514 = smul.addr %s1511, 32
      %s1515 = sadd.s32 %s1513, %s1514
      %s1516 = smul.addr %s1515, 8
      %s1517 = scalar_lea.vmem %s4, %s1516
      // Predicated region
      $region41: #{ipsr_forward.1} parent=31 // pred_check
        %p1518 = pneg %p123
      $region42: #{ipsr_forward.1} parent=31 // pred_check_branch
        %1520 = sbr.rel (%p1518) target = $region44
      $region43: #{ipsr_forward.1} parent=31 // pred_region
        %s1521 = smul.u32 32, %s21
      $region44: #{ipsr_forward.1} parent=31 // pred_fallthru
        _
    $region32: #{ipsr_forward.1} parent=5 // pred_fallthru
      _
    %p1522 = scmp.le.s32.totalorder 2, %s11
    // Predicated region
    $region45: #{ipsr_forward.1} parent=5 // pred_check
      %p1523 = pneg %p1522
    $region46: #{ipsr_forward.1} parent=5 // pred_check_branch
      %1525 = sbr.rel (%p1523) target = $region48
    $region47: #{ipsr_forward.1} parent=5 // pred_region
      %s1526 = ssub.s32 %s11, 2
      // Predicated region
      $region49: #{ipsr_forward.1} parent=47 // pred_check
        %p1527 = pneg %p129
      $region50: #{ipsr_forward.1} parent=47 // pred_check_branch
        %1529 = sbr.rel (%p1527) target = $region52
      $region51: #{ipsr_forward.1} parent=47 // pred_region
        %s1530 = smul.u32 32, %s23
        %p1531 = scmp.lt.s32.totalorder %s22, 1
        %s1532 = scalar_select %p1531, %s22, 1
        %p1533 = scmp.lt.s32.totalorder %s1530, 31
        %s1534 = scalar_select %p1533, %s1530, 31
        %s1535 = smul.addr %s1532, 32
        %s1536 = sadd.s32 %s1534, %s1535
        %s1537 = smul.addr %s1536, 8
        %s1538 = scalar_lea.vmem %s4, %s1537
      $region52: #{ipsr_forward.1} parent=47 // pred_fallthru
        _
    $region48: #{ipsr_forward.1} parent=5 // pred_fallthru
      _
  $region6: #{ipsr_forward.1} parent=0 // loop_footer
    %s15 = sadd.s32 1, %s11
  $region7: #{ipsr_forward.1} parent=0 // loop_footer_branch
    %10 = sbr.rel target = $region3
  $region8: #{ipsr_forward.1} parent=0 // loop_exit
    _

</llo_original>
